<compile_context>
chip_gen: v6e
topology: v6e:2x2x1
jax: 0.10.0
libtpu: 0.0.40
codegen_flags: <defaults>
</compile_context>

<pallas_src>
import numpy as np
import jax
import jax.numpy as jnp
from jax.experimental import pallas as pl
from jax.experimental.pallas import tpu as pltpu


# -----------------------------------------------------------------------------
# Pallas kernel
# -----------------------------------------------------------------------------
def make_ncf_kernel(num_mlp_layers):
    """Builds the NCF kernel body (MLP depth is static, so it is unrolled)."""
    n_mid = 2 * (num_mlp_layers - 1)   # (W, b) pairs after the first layer

    def kernel(mf_u_ref, mf_c_ref, mlp_u_ref, mlp_c_ref,
               w0u_ref, w0c_ref, b0_ref, *rest):
        layer_refs = rest[:n_mid]
        wout_mf_ref, wout_h_ref, bout_ref, out_ref = rest[n_mid:]

        # ---- GMF branch: elementwise product in f32 (VPU; v5e has no bf16 VPU)
        mf_vec = (mf_u_ref[...].astype(jnp.float32)
                  * mf_c_ref[...].astype(jnp.float32))            # (TB, F)

        # ---- MLP branch ------------------------------------------------------
        # cat(mlp_u, mlp_c) @ W0 == mlp_u @ W0[:Dm] + mlp_c @ W0[Dm:]
        # (bf16 operands into the MXU, f32 accumulation.)
        h = (jnp.dot(mlp_u_ref[...], w0u_ref[...],
                     preferred_element_type=jnp.float32)
             + jnp.dot(mlp_c_ref[...], w0c_ref[...],
                       preferred_element_type=jnp.float32)
             + b0_ref[...])
        h = jnp.maximum(h, 0.0)                                   # ReLU (f32)

        for idx in range(num_mlp_layers - 1):
            w_ref = layer_refs[2 * idx]                           # bf16
            b_ref = layer_refs[2 * idx + 1]                       # f32
            h = jnp.dot(h.astype(jnp.bfloat16), w_ref[...],
                        preferred_element_type=jnp.float32) + b_ref[...]
            h = jnp.maximum(h, 0.0)

        # ---- Output layer ----------------------------------------------------
        # cat(mf_vec, h) @ w_out is a degenerate N=1 matmul; do it on the
        # VPU/XLU instead: broadcast-multiply + lane reduction, all f32.
        logits = (jnp.sum(mf_vec * wout_mf_ref[...], axis=-1, keepdims=True)
                  + jnp.sum(h * wout_h_ref[...], axis=-1, keepdims=True)
                  + bout_ref[...])                                # (TB, 1)
        out_ref[...] = jax.nn.sigmoid(logits)

    return kernel


# -----------------------------------------------------------------------------
# Parameter initialization (deterministic, mirrors NCF.__init__ shapes)
# -----------------------------------------------------------------------------
def init_ncf_params(key, user_num, conv_num, factor_dim, mlp_factor_dim,
                    mlp_layers_num):
    # mlp_layers construction exactly as in the PyTorch module
    mlp_layers = [mlp_factor_dim]
    for idx in range(mlp_layers_num - 1):
        mlp_layers.append(mlp_layers[idx] // 2)
    mlp_layers.append(mlp_factor_dim * 2)
    # mlps[idx] : Linear(mlp_layers[idx-1], mlp_layers[idx]); idx=0 uses [-1]
    in_dims = [mlp_layers[idx - 1] for idx in range(mlp_layers_num)]
    out_dims = [mlp_layers[idx] for idx in range(mlp_layers_num)]
    out_in = factor_dim + mlp_layers[mlp_layers_num - 1]

    keys = jax.random.split(key, 4 + 2 * mlp_layers_num + 2)

    def xavier_normal_bf16(k, shape):
        std = (2.0 / (shape[0] + shape[1])) ** 0.5
        return (std * jax.random.normal(k, shape, dtype=jnp.float32)
                ).astype(jnp.bfloat16)

    def linear_init(kw, kb, d_in, d_out, w_dtype):
        bound = 1.0 / np.sqrt(d_in)
        w = jax.random.uniform(kw, (d_in, d_out), jnp.float32, -bound, bound)
        b = jax.random.uniform(kb, (1, d_out), jnp.float32, -bound, bound)
        return w.astype(w_dtype), b          # biases stay f32

    params = {
        # Embedding tables in bf16 (halves HBM bytes on the dominant term).
        "mf_user_emb": xavier_normal_bf16(keys[0], (user_num, factor_dim)),
        "mf_conv_emb": xavier_normal_bf16(keys[1], (conv_num, factor_dim)),
        "mlp_user_emb": xavier_normal_bf16(keys[2], (user_num, mlp_factor_dim)),
        "mlp_conv_emb": xavier_normal_bf16(keys[3], (conv_num, mlp_factor_dim)),
        "mlp_layers": [],
    }
    for i in range(mlp_layers_num):
        kw, kb = keys[4 + 2 * i], keys[4 + 2 * i + 1]
        params["mlp_layers"].append(
            linear_init(kw, kb, in_dims[i], out_dims[i], jnp.bfloat16))
    kw, kb = keys[4 + 2 * mlp_layers_num], keys[4 + 2 * mlp_layers_num + 1]
    # Output layer is consumed on the VPU in f32.
    params["out_layer"] = linear_init(kw, kb, out_in, 1, jnp.float32)
    return params


# -----------------------------------------------------------------------------
# Wrapper
# -----------------------------------------------------------------------------
def ncf_forward(uc_pairs, params, factor_dim, mlp_factor_dim, mlp_layers_num,
                block_b=128):
    B = uc_pairs.shape[0]
    num_blocks = pl.cdiv(B, block_b)
    B_pad = num_blocks * block_b

    users = uc_pairs[:, 0]
    convs = uc_pairs[:, 1]
    if B_pad != B:
        pad = B_pad - B
        users = jnp.concatenate([users, jnp.zeros((pad,), users.dtype)])
        convs = jnp.concatenate([convs, jnp.zeros((pad,), convs.dtype)])

    # Embedding gathers (data-dependent indexing stays in plain JAX glue).
    # TODO(synk): move these gathers into the kernel (scalar-prefetch the
    # user/conv indices + manual make_async_copy from pl.ANY tables) to avoid
    # a second HBM pass over the gathered rows at production table sizes.
    mf_u = params["mf_user_emb"][users]        # (B_pad, F)   bf16
    mf_c = params["mf_conv_emb"][convs]        # (B_pad, F)   bf16
    mlp_u = params["mlp_user_emb"][users]      # (B_pad, Dm)  bf16
    mlp_c = params["mlp_conv_emb"][convs]      # (B_pad, Dm)  bf16

    # Split concat-consuming weights once, outside the kernel (tiny constants).
    w0, b0 = params["mlp_layers"][0]
    w0_u = w0[:mlp_factor_dim]                 # (Dm, L0) bf16
    w0_c = w0[mlp_factor_dim:]                 # (Dm, L0) bf16
    w_out, b_out = params["out_layer"]         # (F + L_last, 1), (1, 1)  f32
    wout_mf = jnp.transpose(w_out[:factor_dim])   # (1, F)       f32
    wout_h = jnp.transpose(w_out[factor_dim:])    # (1, L_last)  f32

    layer_args = []
    for (w, b) in params["mlp_layers"][1:]:
        layer_args.extend([w, b])

    inputs = ([mf_u, mf_c, mlp_u, mlp_c, w0_u, w0_c, b0]
              + layer_args + [wout_mf, wout_h, b_out])

    def batch_spec(x):
        # Stream (TB, feat) tiles of the gathered embeddings.
        return pl.BlockSpec((block_b, x.shape[1]), lambda i: (i, 0))

    def resident_spec(x):
        # Full array, constant block index -> DMA'd once, VMEM-resident.
        return pl.BlockSpec(x.shape, lambda i: (0, 0))

    in_specs = ([batch_spec(x) for x in (mf_u, mf_c, mlp_u, mlp_c)]
                + [resident_spec(x) for x in inputs[4:]])

    kernel = make_ncf_kernel(mlp_layers_num)

    out = pl.pallas_call(
        kernel,
        out_shape=jax.ShapeDtypeStruct((B_pad, 1), jnp.float32),
        grid=(num_blocks,),
        in_specs=in_specs,
        out_specs=pl.BlockSpec((block_b, 1), lambda i: (i, 0)),
        compiler_params=pltpu.CompilerParams(
            # Batch rows are independent -> shard the grid across TCs on v7x.
            dimension_semantics=("parallel",),
            # Plenty of headroom for double-buffered tiles + resident weights,
            # and safely below the scoped VMEM limit on v5e/v6e/v7x.
            vmem_limit_bytes=32 * 1024 * 1024,
        ),
    )(*inputs)

    return out[:B, 0]                          # matches .view(-1) in torch


# Pure-JAX reference (same dtype policy) for a silent correctness check.
def ncf_reference(uc_pairs, params, factor_dim, mlp_factor_dim, mlp_layers_num):
    users = uc_pairs[:, 0]
    convs = uc_pairs[:, 1]
    mf_vec = (params["mf_user_emb"][users].astype(jnp.float32)
              * params["mf_conv_emb"][convs].astype(jnp.float32))
    h = jnp.concatenate(
        [params["mlp_user_emb"][users], params["mlp_conv_emb"][convs]], axis=1)
    for (w, b) in params["mlp_layers"]:
        h = jnp.maximum(
            jnp.dot(h.astype(jnp.bfloat16), w,
                    preferred_element_type=jnp.float32) + b, 0.0)
    final = jnp.concatenate([mf_vec, h], axis=1)
    w_out, b_out = params["out_layer"]
    return jax.nn.sigmoid(final @ w_out + b_out).reshape(-1)


# -----------------------------------------------------------------------------
if __name__ == "__main__":
    # Small config consistent with the module's forward.
    user_num = 50
    conv_num = 40
    factor_dim = 32          # config.factor_dim
    mlp_factor_dim = 64      # config.text_factor_dim
    mlp_layers_num = 3       # -> mlp_layers = [64, 32, 16, 128]
    batch = 200              # not a multiple of the batch tile -> exercises padding
    block_b = 128            # batch tile (2 grid steps after padding to 256)

    key = jax.random.PRNGKey(0)
    pkey, ukey, ckey = jax.random.split(key, 3)
    params = init_ncf_params(pkey, user_num, conv_num, factor_dim,
                             mlp_factor_dim, mlp_layers_num)

    users = jax.random.randint(ukey, (batch, 1), 0, user_num, dtype=jnp.int32)
    convs = jax.random.randint(ckey, (batch, 1), 0, conv_num, dtype=jnp.int32)
    uc_pairs = jnp.concatenate([users, convs], axis=1)        # (B, 2) int32

    out = ncf_forward(uc_pairs, params, factor_dim, mlp_factor_dim,
                      mlp_layers_num, block_b=block_b)
    out = jax.block_until_ready(out)
    assert out.shape == (batch,)

    ref = ncf_reference(uc_pairs, params, factor_dim, mlp_factor_dim,
                        mlp_layers_num)
    np.testing.assert_allclose(np.asarray(out, dtype=np.float32),
                               np.asarray(ref, dtype=np.float32),
                               rtol=1e-3, atol=1e-3)

    print("KERNEL_OK")
</pallas_src>

<mosaic_0001>
module attributes {stable_mosaic.version = 11 : i64} {
  func.func @kernel(%arg0: i32, %arg1: memref<128x32xbf16, #tpu.memory_space<vmem>>, %arg2: memref<128x32xbf16, #tpu.memory_space<vmem>>, %arg3: memref<128x64xbf16, #tpu.memory_space<vmem>>, %arg4: memref<128x64xbf16, #tpu.memory_space<vmem>>, %arg5: memref<64x64xbf16, #tpu.memory_space<vmem>>, %arg6: memref<64x64xbf16, #tpu.memory_space<vmem>>, %arg7: memref<1x64xf32, #tpu.memory_space<vmem>>, %arg8: memref<64x32xbf16, #tpu.memory_space<vmem>>, %arg9: memref<1x32xf32, #tpu.memory_space<vmem>>, %arg10: memref<32x16xbf16, #tpu.memory_space<vmem>>, %arg11: memref<1x16xf32, #tpu.memory_space<vmem>>, %arg12: memref<1x32xf32, #tpu.memory_space<vmem>>, %arg13: memref<1x16xf32, #tpu.memory_space<vmem>>, %arg14: memref<1x1xf32, #tpu.memory_space<vmem>>, %arg15: memref<128x1xf32, #tpu.memory_space<vmem>>) attributes {dimension_semantics = [#tpu.dimension_semantics<parallel>], iteration_bounds = array<i64: 2>, scalar_prefetch = 0 : i64, scratch_operands = 0 : i64, tpu.core_type = #tpu.core_type<tc>, window_params = [{transform_indices = @transform_0, window_bounds = array<i64: 128, 32>}, {transform_indices = @transform_1, window_bounds = array<i64: 128, 32>}, {transform_indices = @transform_2, window_bounds = array<i64: 128, 64>}, {transform_indices = @transform_3, window_bounds = array<i64: 128, 64>}, {pipeline_mode = #tpu.pipeline_mode<synchronous>, transform_indices = @transform_4, window_bounds = array<i64: 64, 64>}, {pipeline_mode = #tpu.pipeline_mode<synchronous>, transform_indices = @transform_5, window_bounds = array<i64: 64, 64>}, {pipeline_mode = #tpu.pipeline_mode<synchronous>, transform_indices = @transform_6, window_bounds = array<i64: 1, 64>}, {pipeline_mode = #tpu.pipeline_mode<synchronous>, transform_indices = @transform_7, window_bounds = array<i64: 64, 32>}, {pipeline_mode = #tpu.pipeline_mode<synchronous>, transform_indices = @transform_8, window_bounds = array<i64: 1, 32>}, {pipeline_mode = #tpu.pipeline_mode<synchronous>, transform_indices = @transform_9, window_bounds = array<i64: 32, 16>}, {pipeline_mode = #tpu.pipeline_mode<synchronous>, transform_indices = @transform_10, window_bounds = array<i64: 1, 16>}, {pipeline_mode = #tpu.pipeline_mode<synchronous>, transform_indices = @transform_11, window_bounds = array<i64: 1, 32>}, {pipeline_mode = #tpu.pipeline_mode<synchronous>, transform_indices = @transform_12, window_bounds = array<i64: 1, 16>}, {pipeline_mode = #tpu.pipeline_mode<synchronous>, transform_indices = @transform_13, window_bounds = array<i64: 1, 1>}, {transform_indices = @transform_14, window_bounds = array<i64: 128, 1>}]} {
    %c0 = arith.constant 0 : index
    %c0_0 = arith.constant 0 : index
    %0 = vector.load %arg1[%c0, %c0_0] : memref<128x32xbf16, #tpu.memory_space<vmem>>, vector<128x32xbf16>
    %1 = arith.extf %0 : vector<128x32xbf16> to vector<128x32xf32>
    %c0_1 = arith.constant 0 : index
    %c0_2 = arith.constant 0 : index
    %2 = vector.load %arg2[%c0_1, %c0_2] : memref<128x32xbf16, #tpu.memory_space<vmem>>, vector<128x32xbf16>
    %3 = arith.extf %2 : vector<128x32xbf16> to vector<128x32xf32>
    %4 = arith.mulf %1, %3 : vector<128x32xf32>
    %c0_3 = arith.constant 0 : index
    %c0_4 = arith.constant 0 : index
    %5 = vector.load %arg3[%c0_3, %c0_4] : memref<128x64xbf16, #tpu.memory_space<vmem>>, vector<128x64xbf16>
    %c0_5 = arith.constant 0 : index
    %c0_6 = arith.constant 0 : index
    %6 = vector.load %arg5[%c0_5, %c0_6] : memref<64x64xbf16, #tpu.memory_space<vmem>>, vector<64x64xbf16>
    %cst = arith.constant dense<0.000000e+00> : vector<128x64xf32>
    %7 = tpu.matmul %5, %6, %cst {dimension_numbers = #tpu.dot_dimension_numbers<[1], [0], [0], [1], [0, 0, 1, 1], [], []>} : vector<128x64xbf16>, vector<64x64xbf16>, vector<128x64xf32> -> vector<128x64xf32>
    %c0_7 = arith.constant 0 : index
    %c0_8 = arith.constant 0 : index
    %8 = vector.load %arg4[%c0_7, %c0_8] : memref<128x64xbf16, #tpu.memory_space<vmem>>, vector<128x64xbf16>
    %c0_9 = arith.constant 0 : index
    %c0_10 = arith.constant 0 : index
    %9 = vector.load %arg6[%c0_9, %c0_10] : memref<64x64xbf16, #tpu.memory_space<vmem>>, vector<64x64xbf16>
    %cst_11 = arith.constant dense<0.000000e+00> : vector<128x64xf32>
    %10 = tpu.matmul %8, %9, %cst_11 {dimension_numbers = #tpu.dot_dimension_numbers<[1], [0], [0], [1], [0, 0, 1, 1], [], []>} : vector<128x64xbf16>, vector<64x64xbf16>, vector<128x64xf32> -> vector<128x64xf32>
    %11 = arith.addf %7, %10 : vector<128x64xf32>
    %c0_12 = arith.constant 0 : index
    %c0_13 = arith.constant 0 : index
    %12 = vector.load %arg7[%c0_12, %c0_13] : memref<1x64xf32, #tpu.memory_space<vmem>>, vector<1x64xf32>
    %13 = vector.broadcast %12 : vector<1x64xf32> to vector<128x64xf32>
    %14 = arith.addf %11, %13 : vector<128x64xf32>
    %cst_14 = arith.constant 0.000000e+00 : f32
    %15 = vector.broadcast %cst_14 : f32 to vector<128x64xf32>
    %16 = arith.maximumf %14, %15 : vector<128x64xf32>
    %17 = arith.truncf %16 : vector<128x64xf32> to vector<128x64xbf16>
    %c0_15 = arith.constant 0 : index
    %c0_16 = arith.constant 0 : index
    %18 = vector.load %arg8[%c0_15, %c0_16] : memref<64x32xbf16, #tpu.memory_space<vmem>>, vector<64x32xbf16>
    %cst_17 = arith.constant dense<0.000000e+00> : vector<128x32xf32>
    %19 = tpu.matmul %17, %18, %cst_17 {dimension_numbers = #tpu.dot_dimension_numbers<[1], [0], [0], [1], [0, 0, 1, 1], [], []>} : vector<128x64xbf16>, vector<64x32xbf16>, vector<128x32xf32> -> vector<128x32xf32>
    %c0_18 = arith.constant 0 : index
    %c0_19 = arith.constant 0 : index
    %20 = vector.load %arg9[%c0_18, %c0_19] : memref<1x32xf32, #tpu.memory_space<vmem>>, vector<1x32xf32>
    %21 = vector.broadcast %20 : vector<1x32xf32> to vector<128x32xf32>
    %22 = arith.addf %19, %21 : vector<128x32xf32>
    %cst_20 = arith.constant 0.000000e+00 : f32
    %23 = vector.broadcast %cst_20 : f32 to vector<128x32xf32>
    %24 = arith.maximumf %22, %23 : vector<128x32xf32>
    %25 = arith.truncf %24 : vector<128x32xf32> to vector<128x32xbf16>
    %c0_21 = arith.constant 0 : index
    %c0_22 = arith.constant 0 : index
    %26 = vector.load %arg10[%c0_21, %c0_22] : memref<32x16xbf16, #tpu.memory_space<vmem>>, vector<32x16xbf16>
    %cst_23 = arith.constant dense<0.000000e+00> : vector<128x16xf32>
    %27 = tpu.matmul %25, %26, %cst_23 {dimension_numbers = #tpu.dot_dimension_numbers<[1], [0], [0], [1], [0, 0, 1, 1], [], []>} : vector<128x32xbf16>, vector<32x16xbf16>, vector<128x16xf32> -> vector<128x16xf32>
    %c0_24 = arith.constant 0 : index
    %c0_25 = arith.constant 0 : index
    %28 = vector.load %arg11[%c0_24, %c0_25] : memref<1x16xf32, #tpu.memory_space<vmem>>, vector<1x16xf32>
    %29 = vector.broadcast %28 : vector<1x16xf32> to vector<128x16xf32>
    %30 = arith.addf %27, %29 : vector<128x16xf32>
    %cst_26 = arith.constant 0.000000e+00 : f32
    %31 = vector.broadcast %cst_26 : f32 to vector<128x16xf32>
    %32 = arith.maximumf %30, %31 : vector<128x16xf32>
    %c0_27 = arith.constant 0 : index
    %c0_28 = arith.constant 0 : index
    %33 = vector.load %arg12[%c0_27, %c0_28] : memref<1x32xf32, #tpu.memory_space<vmem>>, vector<1x32xf32>
    %34 = vector.broadcast %33 : vector<1x32xf32> to vector<128x32xf32>
    %35 = arith.mulf %4, %34 : vector<128x32xf32>
    %cst_29 = arith.constant dense<0.000000e+00> : vector<128xf32>
    %36 = vector.multi_reduction <add>, %35, %cst_29 [1] : vector<128x32xf32> to vector<128xf32>
    %37 = vector.shape_cast %36 : vector<128xf32> to vector<128x1xf32>
    %c0_30 = arith.constant 0 : index
    %c0_31 = arith.constant 0 : index
    %38 = vector.load %arg13[%c0_30, %c0_31] : memref<1x16xf32, #tpu.memory_space<vmem>>, vector<1x16xf32>
    %39 = vector.broadcast %38 : vector<1x16xf32> to vector<128x16xf32>
    %40 = arith.mulf %32, %39 : vector<128x16xf32>
    %cst_32 = arith.constant dense<0.000000e+00> : vector<128xf32>
    %41 = vector.multi_reduction <add>, %40, %cst_32 [1] : vector<128x16xf32> to vector<128xf32>
    %42 = vector.shape_cast %41 : vector<128xf32> to vector<128x1xf32>
    %43 = arith.addf %37, %42 : vector<128x1xf32>
    %c0_33 = arith.constant 0 : index
    %c0_34 = arith.constant 0 : index
    %44 = vector.load %arg14[%c0_33, %c0_34] : memref<1x1xf32, #tpu.memory_space<vmem>>, vector<1x1xf32>
    %45 = vector.broadcast %44 : vector<1x1xf32> to vector<128x1xf32>
    %46 = arith.addf %43, %45 : vector<128x1xf32>
    %47 = arith.negf %46 : vector<128x1xf32>
    %48 = math.exp %47 : vector<128x1xf32>
    %cst_35 = arith.constant 1.000000e+00 : f32
    %49 = vector.broadcast %cst_35 : f32 to vector<128x1xf32>
    %50 = arith.addf %49, %48 : vector<128x1xf32>
    %51 = arith.divf %49, %50 : vector<128x1xf32>
    %c0_36 = arith.constant 0 : index
    %c0_37 = arith.constant 0 : index
    %52 = vector.load %arg15[%c0_36, %c0_37] : memref<128x1xf32, #tpu.memory_space<vmem>>, vector<128x1xf32>
    tpu.vector_store %arg15[%c0_36, %c0_37], %51 {strides = array<i32>} : memref<128x1xf32, #tpu.memory_space<vmem>>, vector<128x1xf32>,
    return
  }
  func.func @transform_0(%arg0: i32) -> (i32, i32) {
    %c0_i32 = arith.constant 0 : i32
    %c0_i32_0 = arith.constant 0 : i32
    return %arg0, %c0_i32 : i32, i32
  }
  func.func @transform_1(%arg0: i32) -> (i32, i32) {
    %c0_i32 = arith.constant 0 : i32
    %c0_i32_0 = arith.constant 0 : i32
    return %arg0, %c0_i32 : i32, i32
  }
  func.func @transform_2(%arg0: i32) -> (i32, i32) {
    %c0_i32 = arith.constant 0 : i32
    %c0_i32_0 = arith.constant 0 : i32
    return %arg0, %c0_i32 : i32, i32
  }
  func.func @transform_3(%arg0: i32) -> (i32, i32) {
    %c0_i32 = arith.constant 0 : i32
    %c0_i32_0 = arith.constant 0 : i32
    return %arg0, %c0_i32 : i32, i32
  }
  func.func @transform_4(%arg0: i32) -> (i32, i32) {
    %c0_i32 = arith.constant 0 : i32
    %c0_i32_0 = arith.constant 0 : i32
    %c0_i32_1 = arith.constant 0 : i32
    return %c0_i32, %c0_i32_0 : i32, i32
  }
  func.func @transform_5(%arg0: i32) -> (i32, i32) {
    %c0_i32 = arith.constant 0 : i32
    %c0_i32_0 = arith.constant 0 : i32
    %c0_i32_1 = arith.constant 0 : i32
    return %c0_i32, %c0_i32_0 : i32, i32
  }
  func.func @transform_6(%arg0: i32) -> (i32, i32) {
    %c0_i32 = arith.constant 0 : i32
    %c0_i32_0 = arith.constant 0 : i32
    %c0_i32_1 = arith.constant 0 : i32
    return %c0_i32, %c0_i32_0 : i32, i32
  }
  func.func @transform_7(%arg0: i32) -> (i32, i32) {
    %c0_i32 = arith.constant 0 : i32
    %c0_i32_0 = arith.constant 0 : i32
    %c0_i32_1 = arith.constant 0 : i32
    return %c0_i32, %c0_i32_0 : i32, i32
  }
  func.func @transform_8(%arg0: i32) -> (i32, i32) {
    %c0_i32 = arith.constant 0 : i32
    %c0_i32_0 = arith.constant 0 : i32
    %c0_i32_1 = arith.constant 0 : i32
    return %c0_i32, %c0_i32_0 : i32, i32
  }
  func.func @transform_9(%arg0: i32) -> (i32, i32) {
    %c0_i32 = arith.constant 0 : i32
    %c0_i32_0 = arith.constant 0 : i32
    %c0_i32_1 = arith.constant 0 : i32
    return %c0_i32, %c0_i32_0 : i32, i32
  }
  func.func @transform_10(%arg0: i32) -> (i32, i32) {
    %c0_i32 = arith.constant 0 : i32
    %c0_i32_0 = arith.constant 0 : i32
    %c0_i32_1 = arith.constant 0 : i32
    return %c0_i32, %c0_i32_0 : i32, i32
  }
  func.func @transform_11(%arg0: i32) -> (i32, i32) {
    %c0_i32 = arith.constant 0 : i32
    %c0_i32_0 = arith.constant 0 : i32
    %c0_i32_1 = arith.constant 0 : i32
    return %c0_i32, %c0_i32_0 : i32, i32
  }
  func.func @transform_12(%arg0: i32) -> (i32, i32) {
    %c0_i32 = arith.constant 0 : i32
    %c0_i32_0 = arith.constant 0 : i32
    %c0_i32_1 = arith.constant 0 : i32
    return %c0_i32, %c0_i32_0 : i32, i32
  }
  func.func @transform_13(%arg0: i32) -> (i32, i32) {
    %c0_i32 = arith.constant 0 : i32
    %c0_i32_0 = arith.constant 0 : i32
    %c0_i32_1 = arith.constant 0 : i32
    return %c0_i32, %c0_i32_0 : i32, i32
  }
  func.func @transform_14(%arg0: i32) -> (i32, i32) {
    %c0_i32 = arith.constant 0 : i32
    %c0_i32_0 = arith.constant 0 : i32
    return %arg0, %c0_i32 : i32, i32
  }
}

</mosaic_0001>

<llo_original>
// kernel: tpu_custom_call.1
$region0: #{tpu_custom_call.1}
  #allocation0 [shape = 'u32[]', space=smem, size = 0x4, offset = 0x4, fixed_abs, tag = 'smem constant byte address 0x4 - core index']
  #allocation1 [shape = 'u32[144,128]{1,0:T(1,128)}', space=vmem, size = 0x12000, scoped, tag = 'internal scratch']
  #allocation2 [shape = 'f32[1,1]{1,0:T(1,128)S(1)}', space=vmem, size = 0x200, scoped, tag = 'scoped memory for tpu_custom_call.1']
  %s0 = inlined_call_operand.vmem [shape: bf16[256,32], index: 0, kind: input, shape index: {}]
  %s1 = inlined_call_operand.vmem [shape: bf16[256,32], index: 1, kind: input, shape index: {}]
  %s2 = inlined_call_operand.vmem [shape: bf16[256,64], index: 2, kind: input, shape index: {}]
  %s3 = inlined_call_operand.vmem [shape: bf16[256,64], index: 3, kind: input, shape index: {}]
  %s4 = inlined_call_operand.vmem [shape: bf16[64,64], index: 4, kind: input, shape index: {}]
  %s5 = inlined_call_operand.vmem [shape: bf16[64,64], index: 5, kind: input, shape index: {}]
  %s6 = inlined_call_operand.vmem [shape: f32[1,64], index: 6, kind: input, shape index: {}]
  %s7 = inlined_call_operand.vmem [shape: bf16[64,32], index: 7, kind: input, shape index: {}]
  %s8 = inlined_call_operand.vmem [shape: f32[1,32], index: 8, kind: input, shape index: {}]
  %s9 = inlined_call_operand.vmem [shape: bf16[32,16], index: 9, kind: input, shape index: {}]
  %s10 = inlined_call_operand.vmem [shape: f32[1,16], index: 10, kind: input, shape index: {}]
  %s11 = inlined_call_operand.vmem [shape: f32[1,32], index: 11, kind: input, shape index: {}]
  %s12 = inlined_call_operand.vmem [shape: f32[1,16], index: 12, kind: input, shape index: {}]
  %s13 = inlined_call_operand.<no memory space> [shape: f32[1,1], index: 13, kind: input, shape index: {}]
  %s14 = inlined_call_operand.vmem [shape: f32[256,1], index: 14, kind: output, shape index: {}]
  %s15 = sld [smem:[#allocation0]]
  $region89: #{tpu_custom_call.1} parent=0
    _
  %s17 = ssub.s32 1, %s15
  %s18 = scalar_select 0, %s17, %s15
  %v19 = vstv %s13
  %20 = vst [vmem:[#allocation2] sm:$0x1] %v19
  loop: start=0, step=1, limit=4
  $region2: #{tpu_custom_call.1} parent=0 // loop_pre_header
    _
  $region3: #{tpu_custom_call.1} parent=0 // loop_header
    %s22 = sphi 0, %s26
    %p23 = scmp.ge.s32.totalorder %s22, 4
    %s32 = sphi 0, %s34
    %s35 = sphi 0, %s32
    %s36 = sphi 0, %s35
    %s52 = sphi 0, %s36
    %s58 = sphi 0, %s60
    %s61 = sphi 0, %s58
    %s62 = sphi 0, %s61
    %s78 = sphi 0, %s62
    %s84 = sphi 0, %s86
    %s87 = sphi 0, %s84
    %s88 = sphi 0, %s87
    %s104 = sphi 0, %s88
    %s110 = sphi 0, %s112
    %s113 = sphi 0, %s110
    %s114 = sphi 0, %s113
    %s130 = sphi 0, %s114
    %s134 = sphi 0, %s134
    %s136 = sphi 0, %s134
    %s137 = sphi 0, %s136
    %s151 = sphi 0, %s137
    %s155 = sphi 0, %s155
    %s157 = sphi 0, %s155
    %s158 = sphi 0, %s157
    %s172 = sphi 0, %s158
    %s176 = sphi 0, %s176
    %s178 = sphi 0, %s176
    %s179 = sphi 0, %s178
    %s193 = sphi 0, %s179
    %s197 = sphi 0, %s197
    %s199 = sphi 0, %s197
    %s200 = sphi 0, %s199
    %s214 = sphi 0, %s200
    %s218 = sphi 0, %s218
    %s220 = sphi 0, %s218
    %s221 = sphi 0, %s220
    %s235 = sphi 0, %s221
    %s239 = sphi 0, %s239
    %s241 = sphi 0, %s239
    %s242 = sphi 0, %s241
    %s256 = sphi 0, %s242
    %s260 = sphi 0, %s260
    %s262 = sphi 0, %s260
    %s263 = sphi 0, %s262
    %s277 = sphi 0, %s263
    %s281 = sphi 0, %s281
    %s283 = sphi 0, %s281
    %s284 = sphi 0, %s283
    %s298 = sphi 0, %s284
    %s302 = sphi 0, %s302
    %s304 = sphi 0, %s302
    %s305 = sphi 0, %s304
    %s319 = sphi 0, %s305
    %s323 = sphi 0, %s323
    %s325 = sphi 0, %s323
    %s326 = sphi 0, %s325
    %s340 = sphi 0, %s326
    %s346 = sphi 0, %s348
    %s349 = sphi 0, %s346
    %s350 = sphi 0, %s349
    %s366 = sphi 0, %s350
  $region4: #{tpu_custom_call.1} parent=0 // loop_header_branch
    %25 = sbr.rel (%p23) target = $region8
  $region5: #{tpu_custom_call.1} parent=0 // loop_body
    %s27 = ssub.s32 %s22, 1
    %s28 = ssub.s32 %s22, 2
    %s29 = sadd.s32 %s22, 1
    %s30 = ssub.s32 %s22, %s29
    %p31 = scmp.eq.s32.totalorder %s30, 0
    %s33 = sadd.s32 %s32, 1
    %s34 = scalar_select %p31, %s32, %s33
    %p37 = pneg %p31
    %p38 = scmp.eq.s32.totalorder %s22, 1
    %p39 = por %p37, %p38
    %p40 = scmp.ne.s32.totalorder %s32, %s35
    %p41 = scmp.eq.s32.totalorder %s22, 0
    %p42 = por %p40, %p41
    %p43 = scmp.ne.s32.totalorder %s32, %s35
    %p44 = scmp.eq.s32.totalorder %s27, 1
    %p45 = por %p43, %p44
    %p46 = scmp.ne.s32.totalorder %s35, %s36
    %p47 = scmp.eq.s32.totalorder %s27, 0
    %p48 = por %p46, %p47
    %p49 = scmp.ne.s32.totalorder %s35, %s36
    %p50 = scmp.eq.s32.totalorder %s28, 1
    %p51 = por %p49, %p50
    %p53 = scmp.ne.s32.totalorder %s36, %s52
    %p54 = scmp.eq.s32.totalorder %s28, 0
    %p55 = por %p53, %p54
    %s56 = ssub.s32 %s22, %s29
    %p57 = scmp.eq.s32.totalorder %s56, 0
    %s59 = sadd.s32 %s58, 1
    %s60 = scalar_select %p57, %s58, %s59
    %p63 = pneg %p57
    %p64 = scmp.eq.s32.totalorder %s22, 1
    %p65 = por %p63, %p64
    %p66 = scmp.ne.s32.totalorder %s58, %s61
    %p67 = scmp.eq.s32.totalorder %s22, 0
    %p68 = por %p66, %p67
    %p69 = scmp.ne.s32.totalorder %s58, %s61
    %p70 = scmp.eq.s32.totalorder %s27, 1
    %p71 = por %p69, %p70
    %p72 = scmp.ne.s32.totalorder %s61, %s62
    %p73 = scmp.eq.s32.totalorder %s27, 0
    %p74 = por %p72, %p73
    %p75 = scmp.ne.s32.totalorder %s61, %s62
    %p76 = scmp.eq.s32.totalorder %s28, 1
    %p77 = por %p75, %p76
    %p79 = scmp.ne.s32.totalorder %s62, %s78
    %p80 = scmp.eq.s32.totalorder %s28, 0
    %p81 = por %p79, %p80
    %s82 = ssub.s32 %s22, %s29
    %p83 = scmp.eq.s32.totalorder %s82, 0
    %s85 = sadd.s32 %s84, 1
    %s86 = scalar_select %p83, %s84, %s85
    %p89 = pneg %p83
    %p90 = scmp.eq.s32.totalorder %s22, 1
    %p91 = por %p89, %p90
    %p92 = scmp.ne.s32.totalorder %s84, %s87
    %p93 = scmp.eq.s32.totalorder %s22, 0
    %p94 = por %p92, %p93
    %p95 = scmp.ne.s32.totalorder %s84, %s87
    %p96 = scmp.eq.s32.totalorder %s27, 1
    %p97 = por %p95, %p96
    %p98 = scmp.ne.s32.totalorder %s87, %s88
    %p99 = scmp.eq.s32.totalorder %s27, 0
    %p100 = por %p98, %p99
    %p101 = scmp.ne.s32.totalorder %s87, %s88
    %p102 = scmp.eq.s32.totalorder %s28, 1
    %p103 = por %p101, %p102
    %p105 = scmp.ne.s32.totalorder %s88, %s104
    %p106 = scmp.eq.s32.totalorder %s28, 0
    %p107 = por %p105, %p106
    %s108 = ssub.s32 %s22, %s29
    %p109 = scmp.eq.s32.totalorder %s108, 0
    %s111 = sadd.s32 %s110, 1
    %s112 = scalar_select %p109, %s110, %s111
    %p115 = pneg %p109
    %p116 = scmp.eq.s32.totalorder %s22, 1
    %p117 = por %p115, %p116
    %p118 = scmp.ne.s32.totalorder %s110, %s113
    %p119 = scmp.eq.s32.totalorder %s22, 0
    %p120 = por %p118, %p119
    %p121 = scmp.ne.s32.totalorder %s110, %s113
    %p122 = scmp.eq.s32.totalorder %s27, 1
    %p123 = por %p121, %p122
    %p124 = scmp.ne.s32.totalorder %s113, %s114
    %p125 = scmp.eq.s32.totalorder %s27, 0
    %p126 = por %p124, %p125
    %p127 = scmp.ne.s32.totalorder %s113, %s114
    %p128 = scmp.eq.s32.totalorder %s28, 1
    %p129 = por %p127, %p128
    %p131 = scmp.ne.s32.totalorder %s114, %s130
    %p132 = scmp.eq.s32.totalorder %s28, 0
    %p133 = por %p131, %p132
    %s135 = sadd.s32 %s134, 1
    %p138 = scmp.eq.s32.totalorder %s22, 1
    %p139 = scmp.ne.s32.totalorder %s134, %s136
    %p140 = scmp.eq.s32.totalorder %s22, 0
    %p141 = por %p139, %p140
    %p142 = scmp.ne.s32.totalorder %s134, %s136
    %p143 = scmp.eq.s32.totalorder %s27, 1
    %p144 = por %p142, %p143
    %p145 = scmp.ne.s32.totalorder %s136, %s137
    %p146 = scmp.eq.s32.totalorder %s27, 0
    %p147 = por %p145, %p146
    %p148 = scmp.ne.s32.totalorder %s136, %s137
    %p149 = scmp.eq.s32.totalorder %s28, 1
    %p150 = por %p148, %p149
    %p152 = scmp.ne.s32.totalorder %s137, %s151
    %p153 = scmp.eq.s32.totalorder %s28, 0
    %p154 = por %p152, %p153
    %s156 = sadd.s32 %s155, 1
    %p159 = scmp.eq.s32.totalorder %s22, 1
    %p160 = scmp.ne.s32.totalorder %s155, %s157
    %p161 = scmp.eq.s32.totalorder %s22, 0
    %p162 = por %p160, %p161
    %p163 = scmp.ne.s32.totalorder %s155, %s157
    %p164 = scmp.eq.s32.totalorder %s27, 1
    %p165 = por %p163, %p164
    %p166 = scmp.ne.s32.totalorder %s157, %s158
    %p167 = scmp.eq.s32.totalorder %s27, 0
    %p168 = por %p166, %p167
    %p169 = scmp.ne.s32.totalorder %s157, %s158
    %p170 = scmp.eq.s32.totalorder %s28, 1
    %p171 = por %p169, %p170
    %p173 = scmp.ne.s32.totalorder %s158, %s172
    %p174 = scmp.eq.s32.totalorder %s28, 0
    %p175 = por %p173, %p174
    %s177 = sadd.s32 %s176, 1
    %p180 = scmp.eq.s32.totalorder %s22, 1
    %p181 = scmp.ne.s32.totalorder %s176, %s178
    %p182 = scmp.eq.s32.totalorder %s22, 0
    %p183 = por %p181, %p182
    %p184 = scmp.ne.s32.totalorder %s176, %s178
    %p185 = scmp.eq.s32.totalorder %s27, 1
    %p186 = por %p184, %p185
    %p187 = scmp.ne.s32.totalorder %s178, %s179
    %p188 = scmp.eq.s32.totalorder %s27, 0
    %p189 = por %p187, %p188
    %p190 = scmp.ne.s32.totalorder %s178, %s179
    %p191 = scmp.eq.s32.totalorder %s28, 1
    %p192 = por %p190, %p191
    %p194 = scmp.ne.s32.totalorder %s179, %s193
    %p195 = scmp.eq.s32.totalorder %s28, 0
    %p196 = por %p194, %p195
    %s198 = sadd.s32 %s197, 1
    %p201 = scmp.eq.s32.totalorder %s22, 1
    %p202 = scmp.ne.s32.totalorder %s197, %s199
    %p203 = scmp.eq.s32.totalorder %s22, 0
    %p204 = por %p202, %p203
    %p205 = scmp.ne.s32.totalorder %s197, %s199
    %p206 = scmp.eq.s32.totalorder %s27, 1
    %p207 = por %p205, %p206
    %p208 = scmp.ne.s32.totalorder %s199, %s200
    %p209 = scmp.eq.s32.totalorder %s27, 0
    %p210 = por %p208, %p209
    %p211 = scmp.ne.s32.totalorder %s199, %s200
    %p212 = scmp.eq.s32.totalorder %s28, 1
    %p213 = por %p211, %p212
    %p215 = scmp.ne.s32.totalorder %s200, %s214
    %p216 = scmp.eq.s32.totalorder %s28, 0
    %p217 = por %p215, %p216
    %s219 = sadd.s32 %s218, 1
    %p222 = scmp.eq.s32.totalorder %s22, 1
    %p223 = scmp.ne.s32.totalorder %s218, %s220
    %p224 = scmp.eq.s32.totalorder %s22, 0
    %p225 = por %p223, %p224
    %p226 = scmp.ne.s32.totalorder %s218, %s220
    %p227 = scmp.eq.s32.totalorder %s27, 1
    %p228 = por %p226, %p227
    %p229 = scmp.ne.s32.totalorder %s220, %s221
    %p230 = scmp.eq.s32.totalorder %s27, 0
    %p231 = por %p229, %p230
    %p232 = scmp.ne.s32.totalorder %s220, %s221
    %p233 = scmp.eq.s32.totalorder %s28, 1
    %p234 = por %p232, %p233
    %p236 = scmp.ne.s32.totalorder %s221, %s235
    %p237 = scmp.eq.s32.totalorder %s28, 0
    %p238 = por %p236, %p237
    %s240 = sadd.s32 %s239, 1
    %p243 = scmp.eq.s32.totalorder %s22, 1
    %p244 = scmp.ne.s32.totalorder %s239, %s241
    %p245 = scmp.eq.s32.totalorder %s22, 0
    %p246 = por %p244, %p245
    %p247 = scmp.ne.s32.totalorder %s239, %s241
    %p248 = scmp.eq.s32.totalorder %s27, 1
    %p249 = por %p247, %p248
    %p250 = scmp.ne.s32.totalorder %s241, %s242
    %p251 = scmp.eq.s32.totalorder %s27, 0
    %p252 = por %p250, %p251
    %p253 = scmp.ne.s32.totalorder %s241, %s242
    %p254 = scmp.eq.s32.totalorder %s28, 1
    %p255 = por %p253, %p254
    %p257 = scmp.ne.s32.totalorder %s242, %s256
    %p258 = scmp.eq.s32.totalorder %s28, 0
    %p259 = por %p257, %p258
    %s261 = sadd.s32 %s260, 1
    %p264 = scmp.eq.s32.totalorder %s22, 1
    %p265 = scmp.ne.s32.totalorder %s260, %s262
    %p266 = scmp.eq.s32.totalorder %s22, 0
    %p267 = por %p265, %p266
    %p268 = scmp.ne.s32.totalorder %s260, %s262
    %p269 = scmp.eq.s32.totalorder %s27, 1
    %p270 = por %p268, %p269
    %p271 = scmp.ne.s32.totalorder %s262, %s263
    %p272 = scmp.eq.s32.totalorder %s27, 0
    %p273 = por %p271, %p272
    %p274 = scmp.ne.s32.totalorder %s262, %s263
    %p275 = scmp.eq.s32.totalorder %s28, 1
    %p276 = por %p274, %p275
    %p278 = scmp.ne.s32.totalorder %s263, %s277
    %p279 = scmp.eq.s32.totalorder %s28, 0
    %p280 = por %p278, %p279
    %s282 = sadd.s32 %s281, 1
    %p285 = scmp.eq.s32.totalorder %s22, 1
    %p286 = scmp.ne.s32.totalorder %s281, %s283
    %p287 = scmp.eq.s32.totalorder %s22, 0
    %p288 = por %p286, %p287
    %p289 = scmp.ne.s32.totalorder %s281, %s283
    %p290 = scmp.eq.s32.totalorder %s27, 1
    %p291 = por %p289, %p290
    %p292 = scmp.ne.s32.totalorder %s283, %s284
    %p293 = scmp.eq.s32.totalorder %s27, 0
    %p294 = por %p292, %p293
    %p295 = scmp.ne.s32.totalorder %s283, %s284
    %p296 = scmp.eq.s32.totalorder %s28, 1
    %p297 = por %p295, %p296
    %p299 = scmp.ne.s32.totalorder %s284, %s298
    %p300 = scmp.eq.s32.totalorder %s28, 0
    %p301 = por %p299, %p300
    %s303 = sadd.s32 %s302, 1
    %p306 = scmp.eq.s32.totalorder %s22, 1
    %p307 = scmp.ne.s32.totalorder %s302, %s304
    %p308 = scmp.eq.s32.totalorder %s22, 0
    %p309 = por %p307, %p308
    %p310 = scmp.ne.s32.totalorder %s302, %s304
    %p311 = scmp.eq.s32.totalorder %s27, 1
    %p312 = por %p310, %p311
    %p313 = scmp.ne.s32.totalorder %s304, %s305
    %p314 = scmp.eq.s32.totalorder %s27, 0
    %p315 = por %p313, %p314
    %p316 = scmp.ne.s32.totalorder %s304, %s305
    %p317 = scmp.eq.s32.totalorder %s28, 1
    %p318 = por %p316, %p317
    %p320 = scmp.ne.s32.totalorder %s305, %s319
    %p321 = scmp.eq.s32.totalorder %s28, 0
    %p322 = por %p320, %p321
    %s324 = sadd.s32 %s323, 1
    %p327 = scmp.eq.s32.totalorder %s22, 1
    %p328 = scmp.ne.s32.totalorder %s323, %s325
    %p329 = scmp.eq.s32.totalorder %s22, 0
    %p330 = por %p328, %p329
    %p331 = scmp.ne.s32.totalorder %s323, %s325
    %p332 = scmp.eq.s32.totalorder %s27, 1
    %p333 = por %p331, %p332
    %p334 = scmp.ne.s32.totalorder %s325, %s326
    %p335 = scmp.eq.s32.totalorder %s27, 0
    %p336 = por %p334, %p335
    %p337 = scmp.ne.s32.totalorder %s325, %s326
    %p338 = scmp.eq.s32.totalorder %s28, 1
    %p339 = por %p337, %p338
    %p341 = scmp.ne.s32.totalorder %s326, %s340
    %p342 = scmp.eq.s32.totalorder %s28, 0
    %p343 = por %p341, %p342
    %s344 = ssub.s32 %s22, %s29
    %p345 = scmp.eq.s32.totalorder %s344, 0
    %s347 = sadd.s32 %s346, 1
    %s348 = scalar_select %p345, %s346, %s347
    %p351 = pneg %p345
    %p352 = scmp.eq.s32.totalorder %s22, 1
    %p353 = por %p351, %p352
    %p354 = scmp.ne.s32.totalorder %s346, %s349
    %p355 = scmp.eq.s32.totalorder %s22, 0
    %p356 = por %p354, %p355
    %p357 = scmp.ne.s32.totalorder %s346, %s349
    %p358 = scmp.eq.s32.totalorder %s27, 1
    %p359 = por %p357, %p358
    %p360 = scmp.ne.s32.totalorder %s349, %s350
    %p361 = scmp.eq.s32.totalorder %s27, 0
    %p362 = por %p360, %p361
    %p363 = scmp.ne.s32.totalorder %s349, %s350
    %p364 = scmp.eq.s32.totalorder %s28, 1
    %p365 = por %p363, %p364
    %p367 = scmp.ne.s32.totalorder %s350, %s366
    %p368 = scmp.eq.s32.totalorder %s28, 0
    %p369 = por %p367, %p368
    %p370 = scmp.le.s32.totalorder 1, %s22
    %p371 = scmp.lt.s32.totalorder %s22, 3
    %p372 = pnand %p370, %p371
    %p373 = pneg %p372
    // Predicated region
    $region9: #{tpu_custom_call.1} parent=5 // pred_check
      _
    $region10: #{tpu_custom_call.1} parent=5 // pred_check_branch
      %375 = sbr.rel (%p372) target = $region12
    $region11: #{tpu_custom_call.1} parent=5 // pred_region
      %s376 = ssub.s32 %s22, 1
      // Predicated region
      $region13: #{tpu_custom_call.1} parent=11 // pred_check
        %p377 = pneg %p147
      $region14: #{tpu_custom_call.1} parent=11 // pred_check_branch
        %379 = sbr.rel (%p377) target = $region16
      $region15: #{tpu_custom_call.1} parent=11 // pred_region
        _
      $region16: #{tpu_custom_call.1} parent=11 // pred_fallthru
        _
      // Predicated region
      $region17: #{tpu_custom_call.1} parent=11 // pred_check
        %p380 = pneg %p168
      $region18: #{tpu_custom_call.1} parent=11 // pred_check_branch
        %382 = sbr.rel (%p380) target = $region20
      $region19: #{tpu_custom_call.1} parent=11 // pred_region
        _
      $region20: #{tpu_custom_call.1} parent=11 // pred_fallthru
        _
      // Predicated region
      $region21: #{tpu_custom_call.1} parent=11 // pred_check
        %p383 = pneg %p189
      $region22: #{tpu_custom_call.1} parent=11 // pred_check_branch
        %385 = sbr.rel (%p383) target = $region24
      $region23: #{tpu_custom_call.1} parent=11 // pred_region
        _
      $region24: #{tpu_custom_call.1} parent=11 // pred_fallthru
        _
      // Predicated region
      $region25: #{tpu_custom_call.1} parent=11 // pred_check
        %p386 = pneg %p210
      $region26: #{tpu_custom_call.1} parent=11 // pred_check_branch
        %388 = sbr.rel (%p386) target = $region28
      $region27: #{tpu_custom_call.1} parent=11 // pred_region
        _
      $region28: #{tpu_custom_call.1} parent=11 // pred_fallthru
        _
      // Predicated region
      $region29: #{tpu_custom_call.1} parent=11 // pred_check
        %p389 = pneg %p231
      $region30: #{tpu_custom_call.1} parent=11 // pred_check_branch
        %391 = sbr.rel (%p389) target = $region32
      $region31: #{tpu_custom_call.1} parent=11 // pred_region
        _
      $region32: #{tpu_custom_call.1} parent=11 // pred_fallthru
        _
      // Predicated region
      $region33: #{tpu_custom_call.1} parent=11 // pred_check
        %p392 = pneg %p252
      $region34: #{tpu_custom_call.1} parent=11 // pred_check_branch
        %394 = sbr.rel (%p392) target = $region36
      $region35: #{tpu_custom_call.1} parent=11 // pred_region
        _
      $region36: #{tpu_custom_call.1} parent=11 // pred_fallthru
        _
      // Predicated region
      $region37: #{tpu_custom_call.1} parent=11 // pred_check
        %p395 = pneg %p273
      $region38: #{tpu_custom_call.1} parent=11 // pred_check_branch
        %397 = sbr.rel (%p395) target = $region40
      $region39: #{tpu_custom_call.1} parent=11 // pred_region
        _
      $region40: #{tpu_custom_call.1} parent=11 // pred_fallthru
        _
      // Predicated region
      $region41: #{tpu_custom_call.1} parent=11 // pred_check
        %p398 = pneg %p294
      $region42: #{tpu_custom_call.1} parent=11 // pred_check_branch
        %400 = sbr.rel (%p398) target = $region44
      $region43: #{tpu_custom_call.1} parent=11 // pred_region
        _
      $region44: #{tpu_custom_call.1} parent=11 // pred_fallthru
        _
      // Predicated region
      $region45: #{tpu_custom_call.1} parent=11 // pred_check
        %p401 = pneg %p315
      $region46: #{tpu_custom_call.1} parent=11 // pred_check_branch
        %403 = sbr.rel (%p401) target = $region48
      $region47: #{tpu_custom_call.1} parent=11 // pred_region
        _
      $region48: #{tpu_custom_call.1} parent=11 // pred_fallthru
        _
      // Predicated region
      $region49: #{tpu_custom_call.1} parent=11 // pred_check
        %p404 = pneg %p336
      $region50: #{tpu_custom_call.1} parent=11 // pred_check_branch
        %406 = sbr.rel (%p404) target = $region52
      $region51: #{tpu_custom_call.1} parent=11 // pred_region
        _
      $region52: #{tpu_custom_call.1} parent=11 // pred_fallthru
        _
    $region12: #{tpu_custom_call.1} parent=5 // pred_fallthru
      _
    %p407 = scmp.lt.s32.totalorder %s22, 2
    // Predicated region
    $region53: #{tpu_custom_call.1} parent=5 // pred_check
      %p408 = pneg %p407
    $region54: #{tpu_custom_call.1} parent=5 // pred_check_branch
      %410 = sbr.rel (%p408) target = $region56
    $region55: #{tpu_custom_call.1} parent=5 // pred_region
      // Predicated region
      $region57: #{tpu_custom_call.1} parent=55 // pred_check
        %p411 = pneg %p42
      $region58: #{tpu_custom_call.1} parent=55 // pred_check_branch
        %413 = sbr.rel (%p411) target = $region60
      $region59: #{tpu_custom_call.1} parent=55 // pred_region
        %s414 = smul.u32 16, %s22
        %p415 = scmp.lt.s32.totalorder %s414, 31
        %s416 = scalar_select %p415, %s414, 31
        %s417 = smul.addr %s416, 4
        %s418 = scalar_lea.vmem %s0, %s417
        %s419 = smul.u32 16, %s22
      $region60: #{tpu_custom_call.1} parent=55 // pred_fallthru
        _
      // Predicated region
      $region61: #{tpu_custom_call.1} parent=55 // pred_check
        %p420 = pneg %p68
      $region62: #{tpu_custom_call.1} parent=55 // pred_check_branch
        %422 = sbr.rel (%p420) target = $region64
      $region63: #{tpu_custom_call.1} parent=55 // pred_region
        %s423 = smul.u32 16, %s22
        %p424 = scmp.lt.s32.totalorder %s423, 31
        %s425 = scalar_select %p424, %s423, 31
        %s426 = smul.addr %s425, 4
        %s427 = scalar_lea.vmem %s1, %s426
        %s428 = smul.u32 16, %s22
      $region64: #{tpu_custom_call.1} parent=55 // pred_fallthru
        _
      // Predicated region
      $region65: #{tpu_custom_call.1} parent=55 // pred_check
        %p429 = pneg %p94
      $region66: #{tpu_custom_call.1} parent=55 // pred_check_branch
        %431 = sbr.rel (%p429) target = $region68
      $region67: #{tpu_custom_call.1} parent=55 // pred_region
        %s432 = smul.u32 16, %s22
        %p433 = scmp.lt.s32.totalorder %s432, 31
        %s434 = scalar_select %p433, %s432, 31
        %s435 = smul.addr %s434, 4
        %s436 = scalar_lea.vmem %s2, %s435
        %s437 = smul.u32 16, %s22
      $region68: #{tpu_custom_call.1} parent=55 // pred_fallthru
        _
      // Predicated region
      $region69: #{tpu_custom_call.1} parent=55 // pred_check
        %p438 = pneg %p120
      $region70: #{tpu_custom_call.1} parent=55 // pred_check_branch
        %440 = sbr.rel (%p438) target = $region72
      $region71: #{tpu_custom_call.1} parent=55 // pred_region
        %s441 = smul.u32 16, %s22
        %p442 = scmp.lt.s32.totalorder %s441, 31
        %s443 = scalar_select %p442, %s441, 31
        %s444 = smul.addr %s443, 4
        %s445 = scalar_lea.vmem %s3, %s444
        %s446 = smul.u32 16, %s22
      $region72: #{tpu_custom_call.1} parent=55 // pred_fallthru
        _
    $region56: #{tpu_custom_call.1} parent=5 // pred_fallthru
      _
    %p447 = scmp.le.s32.totalorder 1, %s22
    %p448 = scmp.lt.s32.totalorder %s22, 3
    %p449 = pnand %p447, %p448
    %p450 = pneg %p449
    // Predicated region
    $region73: #{tpu_custom_call.1} parent=5 // pred_check
      _
    $region74: #{tpu_custom_call.1} parent=5 // pred_check_branch
      %452 = sbr.rel (%p449) target = $region76
    $region75: #{tpu_custom_call.1} parent=5 // pred_region
      %s453 = ssub.s32 %s22, 1
      %s454 = smul.u32 16, %s27
      %p455 = scmp.lt.s32.totalorder %s454, 31
      %s456 = scalar_select %p455, %s454, 31
      %s457 = smul.addr %s456, 4
      %s458 = scalar_lea.vmem %s0, %s457
      %p459 = pneg %p48
      %p460 = pneg %p45
      %s461 = smul.u32 16, %s27
      %p462 = scmp.lt.s32.totalorder %s461, 31
      %s463 = scalar_select %p462, %s461, 31
      %s464 = smul.addr %s463, 4
      %s465 = scalar_lea.vmem %s1, %s464
      %p466 = pneg %p74
      %p467 = pneg %p71
      %s468 = smul.u32 16, %s27
      %p469 = scmp.lt.s32.totalorder %s468, 31
      %s470 = scalar_select %p469, %s468, 31
      %s471 = smul.addr %s470, 4
      %s472 = scalar_lea.vmem %s2, %s471
      %p473 = pneg %p100
      %p474 = pneg %p97
      %s475 = smul.u32 16, %s27
      %p476 = scmp.lt.s32.totalorder %s475, 31
      %s477 = scalar_select %p476, %s475, 31
      %s478 = smul.addr %s477, 4
      %s479 = scalar_lea.vmem %s3, %s478
      %p480 = pneg %p126
      %p481 = pneg %p123
      %p482 = pneg %p147
      %p483 = pneg %p144
      %p484 = pneg %p168
      %p485 = pneg %p165
      %p486 = pneg %p189
      %p487 = pneg %p186
      %p488 = pneg %p210
      %p489 = pneg %p207
      %p490 = pneg %p231
      %p491 = pneg %p228
      %p492 = pneg %p252
      %p493 = pneg %p249
      %p494 = pneg %p273
      %p495 = pneg %p270
      %p496 = pneg %p294
      %p497 = pneg %p291
      %p498 = pneg %p315
      %p499 = pneg %p312
      %p500 = pneg %p336
      %p501 = pneg %p333
      %p502 = pneg %p362
      %p503 = pneg %p359
      %s504 = smul.u32 16, %s27
      %p505 = scmp.lt.s32.totalorder %s504, 31
      %s506 = scalar_select %p505, %s504, 31
      %s507 = smul.addr %s506, 8
      %s508 = scalar_lea.vmem %s14, %s507
      %s509 = smul.u32 16, %s27
      %p510 = scmp.lt.s32.totalorder %s509, 31
      %s511 = scalar_select %p510, %s509, 31
      %s512 = smul.addr %s511, 4
      %s513 = scalar_lea.vmem %s0, %s512
      %s514 = smul.u32 16, %s27
      %s515 = smul.u32 16, %s27
      %p516 = scmp.lt.s32.totalorder %s515, 31
      %s517 = scalar_select %p516, %s515, 31
      %s518 = smul.addr %s517, 4
      %s519 = scalar_lea.vmem %s1, %s518
      %s520 = smul.u32 16, %s27
      %s521 = smul.u32 16, %s27
      %p522 = scmp.lt.s32.totalorder %s521, 31
      %s523 = scalar_select %p522, %s521, 31
      %s524 = smul.addr %s523, 4
      %s525 = scalar_lea.vmem %s2, %s524
      %s526 = smul.u32 16, %s27
      %s527 = smul.u32 16, %s27
      %p528 = scmp.lt.s32.totalorder %s527, 31
      %s529 = scalar_select %p528, %s527, 31
      %s530 = smul.addr %s529, 4
      %s531 = scalar_lea.vmem %s3, %s530
      %s532 = smul.u32 16, %s27
      %s533 = smul.u32 16, %s27
      %p534 = scmp.lt.s32.totalorder %s533, 31
      %s535 = scalar_select %p534, %s533, 31
      %s536 = smul.addr %s535, 8
      %s537 = scalar_lea.vmem %s14, %s536
      %s538 = smul.u32 16, %s27
      %v540 = vld [vmem:[%s513] sm:$0xf]
      %v541 = vld [vmem:[%s513 + $0x4] sm:$0xf]
      %v542 = vld [vmem:[%s513 + $0x8] sm:$0xf]
      %v543 = vld [vmem:[%s513 + $0xc] sm:$0xf]
      %v544 = vld [vmem:[%s513 + $0x10] sm:$0xf]
      %v545 = vld [vmem:[%s513 + $0x14] sm:$0xf]
      %v546 = vld [vmem:[%s513 + $0x18] sm:$0xf]
      %v547 = vld [vmem:[%s513 + $0x1c] sm:$0xf]
      %v548 = vld [vmem:[%s513 + $0x20] sm:$0xf]
      %v549 = vld [vmem:[%s513 + $0x24] sm:$0xf]
      %v550 = vld [vmem:[%s513 + $0x28] sm:$0xf]
      %v551 = vld [vmem:[%s513 + $0x2c] sm:$0xf]
      %v552 = vld [vmem:[%s513 + $0x30] sm:$0xf]
      %v553 = vld [vmem:[%s513 + $0x34] sm:$0xf]
      %v554 = vld [vmem:[%s513 + $0x38] sm:$0xf]
      %v555 = vld [vmem:[%s513 + $0x3c] sm:$0xf]
      %v556 = vunpack.c.l.bf16 %v540
      %v557 = vunpack.c.l.bf16 %v541
      %v558 = vunpack.c.l.bf16 %v542
      %v559 = vunpack.c.l.bf16 %v543
      %v560 = vunpack.c.l.bf16 %v544
      %v561 = vunpack.c.l.bf16 %v545
      %v562 = vunpack.c.l.bf16 %v546
      %v563 = vunpack.c.l.bf16 %v547
      %v564 = vunpack.c.l.bf16 %v548
      %v565 = vunpack.c.l.bf16 %v549
      %v566 = vunpack.c.l.bf16 %v550
      %v567 = vunpack.c.l.bf16 %v551
      %v568 = vunpack.c.l.bf16 %v552
      %v569 = vunpack.c.l.bf16 %v553
      %v570 = vunpack.c.l.bf16 %v554
      %v571 = vunpack.c.l.bf16 %v555
      %v572 = vld [vmem:[%s519] sm:$0xf]
      %v573 = vld [vmem:[%s519 + $0x4] sm:$0xf]
      %v574 = vld [vmem:[%s519 + $0x8] sm:$0xf]
      %v575 = vld [vmem:[%s519 + $0xc] sm:$0xf]
      %v576 = vld [vmem:[%s519 + $0x10] sm:$0xf]
      %v577 = vld [vmem:[%s519 + $0x14] sm:$0xf]
      %v578 = vld [vmem:[%s519 + $0x18] sm:$0xf]
      %v579 = vld [vmem:[%s519 + $0x1c] sm:$0xf]
      %v580 = vld [vmem:[%s519 + $0x20] sm:$0xf]
      %v581 = vld [vmem:[%s519 + $0x24] sm:$0xf]
      %v582 = vld [vmem:[%s519 + $0x28] sm:$0xf]
      %v583 = vld [vmem:[%s519 + $0x2c] sm:$0xf]
      %v584 = vld [vmem:[%s519 + $0x30] sm:$0xf]
      %v585 = vld [vmem:[%s519 + $0x34] sm:$0xf]
      %v586 = vld [vmem:[%s519 + $0x38] sm:$0xf]
      %v587 = vld [vmem:[%s519 + $0x3c] sm:$0xf]
      %v588 = vunpack.c.l.bf16 %v572
      %v589 = vunpack.c.l.bf16 %v573
      %v590 = vunpack.c.l.bf16 %v574
      %v591 = vunpack.c.l.bf16 %v575
      %v592 = vunpack.c.l.bf16 %v576
      %v593 = vunpack.c.l.bf16 %v577
      %v594 = vunpack.c.l.bf16 %v578
      %v595 = vunpack.c.l.bf16 %v579
      %v596 = vunpack.c.l.bf16 %v580
      %v597 = vunpack.c.l.bf16 %v581
      %v598 = vunpack.c.l.bf16 %v582
      %v599 = vunpack.c.l.bf16 %v583
      %v600 = vunpack.c.l.bf16 %v584
      %v601 = vunpack.c.l.bf16 %v585
      %v602 = vunpack.c.l.bf16 %v586
      %v603 = vunpack.c.l.bf16 %v587
      %v604 = vmul.f32 %v556, %v588
      %v605 = vmul.f32 %v557, %v589
      %v606 = vmul.f32 %v558, %v590
      %v607 = vmul.f32 %v559, %v591
      %v608 = vmul.f32 %v560, %v592
      %v609 = vmul.f32 %v561, %v593
      %v610 = vmul.f32 %v562, %v594
      %v611 = vmul.f32 %v563, %v595
      %v612 = vmul.f32 %v564, %v596
      %v613 = vmul.f32 %v565, %v597
      %v614 = vmul.f32 %v566, %v598
      %v615 = vmul.f32 %v567, %v599
      %v616 = vmul.f32 %v568, %v600
      %v617 = vmul.f32 %v569, %v601
      %v618 = vmul.f32 %v570, %v602
      %v619 = vmul.f32 %v571, %v603
      %v620 = vld [vmem:[%s525] sm:$0xf]
      %v621 = vld [vmem:[%s525 + $0x4] sm:$0xf]
      %v622 = vld [vmem:[%s525 + $0x8] sm:$0xf]
      %v623 = vld [vmem:[%s525 + $0xc] sm:$0xf]
      %v624 = vld [vmem:[%s525 + $0x10] sm:$0xf]
      %v625 = vld [vmem:[%s525 + $0x14] sm:$0xf]
      %v626 = vld [vmem:[%s525 + $0x18] sm:$0xf]
      %v627 = vld [vmem:[%s525 + $0x1c] sm:$0xf]
      %v628 = vld [vmem:[%s525 + $0x20] sm:$0xf]
      %v629 = vld [vmem:[%s525 + $0x24] sm:$0xf]
      %v630 = vld [vmem:[%s525 + $0x28] sm:$0xf]
      %v631 = vld [vmem:[%s525 + $0x2c] sm:$0xf]
      %v632 = vld [vmem:[%s525 + $0x30] sm:$0xf]
      %v633 = vld [vmem:[%s525 + $0x34] sm:$0xf]
      %v634 = vld [vmem:[%s525 + $0x38] sm:$0xf]
      %v635 = vld [vmem:[%s525 + $0x3c] sm:$0xf]
      %v636 = vld [vmem:[%s4] sm:$0xf]
      %v637 = vld [vmem:[%s4 + $0x4] sm:$0xf]
      %v638 = vld [vmem:[%s4 + $0x8] sm:$0xf]
      %v639 = vld [vmem:[%s4 + $0xc] sm:$0xf]
      %v640 = vld [vmem:[%s4 + $0x10] sm:$0xf]
      %v641 = vld [vmem:[%s4 + $0x14] sm:$0xf]
      %v642 = vld [vmem:[%s4 + $0x18] sm:$0xf]
      %v643 = vld [vmem:[%s4 + $0x1c] sm:$0xf]
      %v644 = vld [vmem:[%s531] sm:$0xf]
      %v645 = vld [vmem:[%s531 + $0x4] sm:$0xf]
      %v646 = vld [vmem:[%s531 + $0x8] sm:$0xf]
      %v647 = vld [vmem:[%s531 + $0xc] sm:$0xf]
      %v648 = vld [vmem:[%s531 + $0x10] sm:$0xf]
      %v649 = vld [vmem:[%s531 + $0x14] sm:$0xf]
      %v650 = vld [vmem:[%s531 + $0x18] sm:$0xf]
      %v651 = vld [vmem:[%s531 + $0x1c] sm:$0xf]
      %v652 = vld [vmem:[%s531 + $0x20] sm:$0xf]
      %v653 = vld [vmem:[%s531 + $0x24] sm:$0xf]
      %v654 = vld [vmem:[%s531 + $0x28] sm:$0xf]
      %v655 = vld [vmem:[%s531 + $0x2c] sm:$0xf]
      %v656 = vld [vmem:[%s531 + $0x30] sm:$0xf]
      %v657 = vld [vmem:[%s531 + $0x34] sm:$0xf]
      %v658 = vld [vmem:[%s531 + $0x38] sm:$0xf]
      %v659 = vld [vmem:[%s531 + $0x3c] sm:$0xf]
      %v660 = vld [vmem:[%s5] sm:$0xf]
      %v661 = vld [vmem:[%s5 + $0x4] sm:$0xf]
      %v662 = vld [vmem:[%s5 + $0x8] sm:$0xf]
      %v663 = vld [vmem:[%s5 + $0xc] sm:$0xf]
      %v664 = vld [vmem:[%s5 + $0x10] sm:$0xf]
      %v665 = vld [vmem:[%s5 + $0x14] sm:$0xf]
      %v666 = vld [vmem:[%s5 + $0x18] sm:$0xf]
      %v667 = vld [vmem:[%s5 + $0x1c] sm:$0xf]
      %v684 = vunpack.c.l.b16 %v644
      %v685 = vunpack.c.l.b16 %v645
      %v686 = vunpack.c.l.b16 %v646
      %v687 = vunpack.c.l.b16 %v647
      %v688 = vunpack.c.l.b16 %v648
      %v689 = vunpack.c.l.b16 %v649
      %v690 = vunpack.c.l.b16 %v650
      %v691 = vunpack.c.l.b16 %v651
      %v692 = vunpack.c.l.b16 %v652
      %v693 = vunpack.c.l.b16 %v653
      %v694 = vunpack.c.l.b16 %v654
      %v695 = vunpack.c.l.b16 %v655
      %v696 = vunpack.c.l.b16 %v656
      %v697 = vunpack.c.l.b16 %v657
      %v698 = vunpack.c.l.b16 %v658
      %v699 = vunpack.c.l.b16 %v659
      %v700 = vpack.c.b16 %v685, %v684
      %v701 = vpack.c.b16 %v687, %v686
      %v702 = vpack.c.b16 %v689, %v688
      %v703 = vpack.c.b16 %v691, %v690
      %v704 = vpack.c.b16 %v693, %v692
      %v705 = vpack.c.b16 %v695, %v694
      %v706 = vpack.c.b16 %v697, %v696
      %v707 = vpack.c.b16 %v699, %v698
      %v716 = vunpack.c.l.b16 %v660
      %v717 = vunpack.c.l.b16 %v661
      %v718 = vunpack.c.l.b16 %v662
      %v719 = vunpack.c.l.b16 %v663
      %v720 = vunpack.c.l.b16 %v664
      %v721 = vunpack.c.l.b16 %v665
      %v722 = vunpack.c.l.b16 %v666
      %v723 = vunpack.c.l.b16 %v667
      %v724 = vpack.c.b16 %v717, %v716
      %v725 = vpack.c.b16 %v719, %v718
      %v726 = vpack.c.b16 %v721, %v720
      %v727 = vpack.c.b16 %v723, %v722
      %vm732 = vcmask 523264
      %v734 = vsel %vm732, %v700, 0
      %v737 = vsel %vm732, %v701, 0
      %v740 = vsel %vm732, %v702, 0
      %v743 = vsel %vm732, %v703, 0
      %v746 = vsel %vm732, %v704, 0
      %v749 = vsel %vm732, %v705, 0
      %v752 = vsel %vm732, %v706, 0
      %v755 = vsel %vm732, %v707, 0
      %757 = vmatprep.subr.bf16.mxu0 0
      %758 = vmatpush1.bf16.msra.mxu0 0
      %759 = vmatprep.subr.bf16.mxu0 0
      %760 = vmatpush1.bf16.msra.mxu0 0
      %761 = vmatprep.subr.bf16.mxu0 0
      %762 = vmatpush1.bf16.msra.mxu0 0
      %763 = vmatprep.subr.bf16.mxu0 0
      %764 = vmatpush1.bf16.msra.mxu0 0
      %765 = vmatprep.subr.bf16.mxu0 0
      %766 = vmatpush1.bf16.msra.mxu0 %v727
      %767 = vmatprep.subr.bf16.mxu0 0
      %768 = vmatpush1.bf16.msra.mxu0 %v726
      %769 = vmatprep.subr.bf16.mxu0 0
      %770 = vmatpush1.bf16.msra.mxu0 %v725
      %771 = vmatprep.subr.bf16.mxu0 0
      %772 = vmatpush1.bf16.msra.mxu0 %v724
      %773 = vmatprep.subr.bf16.mxu0 0
      %774 = vmatpush2.bf16.msra.mxu0 0
      %775 = vmatprep.subr.bf16.mxu0 0
      %776 = vmatpush2.bf16.msra.mxu0 0
      %777 = vmatprep.subr.bf16.mxu0 0
      %778 = vmatpush2.bf16.msra.mxu0 0
      %779 = vmatprep.subr.bf16.mxu0 0
      %780 = vmatpush2.bf16.msra.mxu0 0
      %781 = vmatprep.subr.bf16.mxu0 0
      %782 = vmatpush2.bf16.msra.mxu0 0
      %783 = vmatprep.subr.bf16.mxu0 0
      %784 = vmatpush2.bf16.msra.mxu0 0
      %785 = vmatprep.subr.bf16.mxu0 0
      %786 = vmatpush2.bf16.msra.mxu0 0
      %787 = vmatprep.subr.bf16.mxu0 0
      %788 = vmatpush2.bf16.msra.mxu0 0
      %789 = vmatprep.mubr.bf16.mxu0 0
      %790 = vmatmul.mubr.bf16.gmra.mxu0 %v734
      %v791 = vpop.f32.mrf.mxu0
      %v792 = vadd.f32 0.0, %v791
      %v793 = vpop.f32.mrf.mxu0
      %v794 = vpop.f32.mrf.mxu0
      %v795 = vadd.f32 0.0, %v794
      %v796 = vpop.f32.mrf.mxu0
      %797 = vmatprep.mubr.bf16.mxu0 0
      %798 = vmatmul.mubr.bf16.gmra.mxu0 %v737
      %v799 = vpop.f32.mrf.mxu0
      %v800 = vadd.f32 0.0, %v799
      %v801 = vpop.f32.mrf.mxu0
      %v802 = vpop.f32.mrf.mxu0
      %v803 = vadd.f32 0.0, %v802
      %v804 = vpop.f32.mrf.mxu0
      %805 = vmatprep.mubr.bf16.mxu0 0
      %806 = vmatmul.mubr.bf16.gmra.mxu0 %v740
      %v807 = vpop.f32.mrf.mxu0
      %v808 = vadd.f32 0.0, %v807
      %v809 = vpop.f32.mrf.mxu0
      %v810 = vpop.f32.mrf.mxu0
      %v811 = vadd.f32 0.0, %v810
      %v812 = vpop.f32.mrf.mxu0
      %813 = vmatprep.mubr.bf16.mxu0 0
      %814 = vmatmul.mubr.bf16.gmra.mxu0 %v743
      %v815 = vpop.f32.mrf.mxu0
      %v816 = vadd.f32 0.0, %v815
      %v817 = vpop.f32.mrf.mxu0
      %v818 = vpop.f32.mrf.mxu0
      %v819 = vadd.f32 0.0, %v818
      %v820 = vpop.f32.mrf.mxu0
      %821 = vmatprep.mubr.bf16.mxu0 0
      %822 = vmatmul.mubr.bf16.gmra.mxu0 %v746
      %v823 = vpop.f32.mrf.mxu0
      %v824 = vadd.f32 0.0, %v823
      %v825 = vpop.f32.mrf.mxu0
      %v826 = vpop.f32.mrf.mxu0
      %v827 = vadd.f32 0.0, %v826
      %v828 = vpop.f32.mrf.mxu0
      %829 = vmatprep.mubr.bf16.mxu0 0
      %830 = vmatmul.mubr.bf16.gmra.mxu0 %v749
      %v831 = vpop.f32.mrf.mxu0
      %v832 = vadd.f32 0.0, %v831
      %v833 = vpop.f32.mrf.mxu0
      %v834 = vpop.f32.mrf.mxu0
      %v835 = vadd.f32 0.0, %v834
      %v836 = vpop.f32.mrf.mxu0
      %837 = vmatprep.mubr.bf16.mxu0 0
      %838 = vmatmul.mubr.bf16.gmra.mxu0 %v752
      %v839 = vpop.f32.mrf.mxu0
      %v840 = vadd.f32 0.0, %v839
      %v841 = vpop.f32.mrf.mxu0
      %v842 = vpop.f32.mrf.mxu0
      %v843 = vadd.f32 0.0, %v842
      %v844 = vpop.f32.mrf.mxu0
      %845 = vmatprep.mubr.bf16.mxu0 0
      %846 = vmatmul.mubr.bf16.gmra.mxu0 %v755
      %v847 = vpop.f32.mrf.mxu0
      %v848 = vadd.f32 0.0, %v847
      %v849 = vpop.f32.mrf.mxu0
      %v850 = vpop.f32.mrf.mxu0
      %v851 = vadd.f32 0.0, %v850
      %v852 = vpop.f32.mrf.mxu0
      %853 = vdwg.mxu0
      %v870 = vunpack.c.l.b16 %v620
      %v871 = vunpack.c.l.b16 %v621
      %v872 = vunpack.c.l.b16 %v622
      %v873 = vunpack.c.l.b16 %v623
      %v874 = vunpack.c.l.b16 %v624
      %v875 = vunpack.c.l.b16 %v625
      %v876 = vunpack.c.l.b16 %v626
      %v877 = vunpack.c.l.b16 %v627
      %v878 = vunpack.c.l.b16 %v628
      %v879 = vunpack.c.l.b16 %v629
      %v880 = vunpack.c.l.b16 %v630
      %v881 = vunpack.c.l.b16 %v631
      %v882 = vunpack.c.l.b16 %v632
      %v883 = vunpack.c.l.b16 %v633
      %v884 = vunpack.c.l.b16 %v634
      %v885 = vunpack.c.l.b16 %v635
      %v886 = vpack.c.b16 %v871, %v870
      %v887 = vpack.c.b16 %v873, %v872
      %v888 = vpack.c.b16 %v875, %v874
      %v889 = vpack.c.b16 %v877, %v876
      %v890 = vpack.c.b16 %v879, %v878
      %v891 = vpack.c.b16 %v881, %v880
      %v892 = vpack.c.b16 %v883, %v882
      %v893 = vpack.c.b16 %v885, %v884
      %v902 = vunpack.c.l.b16 %v636
      %v903 = vunpack.c.l.b16 %v637
      %v904 = vunpack.c.l.b16 %v638
      %v905 = vunpack.c.l.b16 %v639
      %v906 = vunpack.c.l.b16 %v640
      %v907 = vunpack.c.l.b16 %v641
      %v908 = vunpack.c.l.b16 %v642
      %v909 = vunpack.c.l.b16 %v643
      %v910 = vpack.c.b16 %v903, %v902
      %v911 = vpack.c.b16 %v905, %v904
      %v912 = vpack.c.b16 %v907, %v906
      %v913 = vpack.c.b16 %v909, %v908
      %v919 = vsel %vm732, %v886, 0
      %v922 = vsel %vm732, %v887, 0
      %v925 = vsel %vm732, %v888, 0
      %v928 = vsel %vm732, %v889, 0
      %v931 = vsel %vm732, %v890, 0
      %v934 = vsel %vm732, %v891, 0
      %v937 = vsel %vm732, %v892, 0
      %v940 = vsel %vm732, %v893, 0
      %942 = vmatprep.subr.bf16.mxu0 0
      %943 = vmatpush1.bf16.msra.mxu0 0
      %944 = vmatprep.subr.bf16.mxu0 0
      %945 = vmatpush1.bf16.msra.mxu0 0
      %946 = vmatprep.subr.bf16.mxu0 0
      %947 = vmatpush1.bf16.msra.mxu0 0
      %948 = vmatprep.subr.bf16.mxu0 0
      %949 = vmatpush1.bf16.msra.mxu0 0
      %950 = vmatprep.subr.bf16.mxu0 0
      %951 = vmatpush1.bf16.msra.mxu0 %v913
      %952 = vmatprep.subr.bf16.mxu0 0
      %953 = vmatpush1.bf16.msra.mxu0 %v912
      %954 = vmatprep.subr.bf16.mxu0 0
      %955 = vmatpush1.bf16.msra.mxu0 %v911
      %956 = vmatprep.subr.bf16.mxu0 0
      %957 = vmatpush1.bf16.msra.mxu0 %v910
      %958 = vmatprep.subr.bf16.mxu0 0
      %959 = vmatpush2.bf16.msra.mxu0 0
      %960 = vmatprep.subr.bf16.mxu0 0
      %961 = vmatpush2.bf16.msra.mxu0 0
      %962 = vmatprep.subr.bf16.mxu0 0
      %963 = vmatpush2.bf16.msra.mxu0 0
      %964 = vmatprep.subr.bf16.mxu0 0
      %965 = vmatpush2.bf16.msra.mxu0 0
      %966 = vmatprep.subr.bf16.mxu0 0
      %967 = vmatpush2.bf16.msra.mxu0 0
      %968 = vmatprep.subr.bf16.mxu0 0
      %969 = vmatpush2.bf16.msra.mxu0 0
      %970 = vmatprep.subr.bf16.mxu0 0
      %971 = vmatpush2.bf16.msra.mxu0 0
      %972 = vmatprep.subr.bf16.mxu0 0
      %973 = vmatpush2.bf16.msra.mxu0 0
      %974 = vmatprep.mubr.bf16.mxu0 0
      %975 = vmatmul.mubr.bf16.gmra.mxu0 %v919
      %v976 = vpop.f32.mrf.mxu0
      %v977 = vadd.f32 %v792, %v976
      %v978 = vpop.f32.mrf.mxu0
      %v979 = vpop.f32.mrf.mxu0
      %v980 = vadd.f32 %v795, %v979
      %v981 = vpop.f32.mrf.mxu0
      %982 = vmatprep.mubr.bf16.mxu0 0
      %983 = vmatmul.mubr.bf16.gmra.mxu0 %v922
      %v984 = vpop.f32.mrf.mxu0
      %v985 = vadd.f32 %v800, %v984
      %v986 = vpop.f32.mrf.mxu0
      %v987 = vpop.f32.mrf.mxu0
      %v988 = vadd.f32 %v803, %v987
      %v989 = vpop.f32.mrf.mxu0
      %990 = vmatprep.mubr.bf16.mxu0 0
      %991 = vmatmul.mubr.bf16.gmra.mxu0 %v925
      %v992 = vpop.f32.mrf.mxu0
      %v993 = vadd.f32 %v808, %v992
      %v994 = vpop.f32.mrf.mxu0
      %v995 = vpop.f32.mrf.mxu0
      %v996 = vadd.f32 %v811, %v995
      %v997 = vpop.f32.mrf.mxu0
      %998 = vmatprep.mubr.bf16.mxu0 0
      %999 = vmatmul.mubr.bf16.gmra.mxu0 %v928
      %v1000 = vpop.f32.mrf.mxu0
      %v1001 = vadd.f32 %v816, %v1000
      %v1002 = vpop.f32.mrf.mxu0
      %v1003 = vpop.f32.mrf.mxu0
      %v1004 = vadd.f32 %v819, %v1003
      %v1005 = vpop.f32.mrf.mxu0
      %1006 = vmatprep.mubr.bf16.mxu0 0
      %1007 = vmatmul.mubr.bf16.gmra.mxu0 %v931
      %v1008 = vpop.f32.mrf.mxu0
      %v1009 = vadd.f32 %v824, %v1008
      %v1010 = vpop.f32.mrf.mxu0
      %v1011 = vpop.f32.mrf.mxu0
      %v1012 = vadd.f32 %v827, %v1011
      %v1013 = vpop.f32.mrf.mxu0
      %1014 = vmatprep.mubr.bf16.mxu0 0
      %1015 = vmatmul.mubr.bf16.gmra.mxu0 %v934
      %v1016 = vpop.f32.mrf.mxu0
      %v1017 = vadd.f32 %v832, %v1016
      %v1018 = vpop.f32.mrf.mxu0
      %v1019 = vpop.f32.mrf.mxu0
      %v1020 = vadd.f32 %v835, %v1019
      %v1021 = vpop.f32.mrf.mxu0
      %1022 = vmatprep.mubr.bf16.mxu0 0
      %1023 = vmatmul.mubr.bf16.gmra.mxu0 %v937
      %v1024 = vpop.f32.mrf.mxu0
      %v1025 = vadd.f32 %v840, %v1024
      %v1026 = vpop.f32.mrf.mxu0
      %v1027 = vpop.f32.mrf.mxu0
      %v1028 = vadd.f32 %v843, %v1027
      %v1029 = vpop.f32.mrf.mxu0
      %1030 = vmatprep.mubr.bf16.mxu0 0
      %1031 = vmatmul.mubr.bf16.gmra.mxu0 %v940
      %v1032 = vpop.f32.mrf.mxu0
      %v1033 = vadd.f32 %v848, %v1032
      %v1034 = vpop.f32.mrf.mxu0
      %v1035 = vpop.f32.mrf.mxu0
      %v1036 = vadd.f32 %v851, %v1035
      %v1037 = vpop.f32.mrf.mxu0
      %1038 = vdwg.mxu0
      %v1039 = vld [vmem:[%s6] sm:$0x1]
      %v1041 = vlaneseq
      %v1042 = vshrl.u32 %v1041, 7
      %v1043 = vsub.s32 0, %v1042
      %v1044 = vrot.slane %v1039, %v1043
      %v1046 = vadd.f32 %v977, %v1044
      %v1047 = vadd.f32 %v980, %v1044
      %v1048 = vadd.f32 %v985, %v1044
      %v1049 = vadd.f32 %v988, %v1044
      %v1050 = vadd.f32 %v993, %v1044
      %v1051 = vadd.f32 %v996, %v1044
      %v1052 = vadd.f32 %v1001, %v1044
      %v1053 = vadd.f32 %v1004, %v1044
      %v1054 = vadd.f32 %v1009, %v1044
      %v1055 = vadd.f32 %v1012, %v1044
      %v1056 = vadd.f32 %v1017, %v1044
      %v1057 = vadd.f32 %v1020, %v1044
      %v1058 = vadd.f32 %v1025, %v1044
      %v1059 = vadd.f32 %v1028, %v1044
      %v1060 = vadd.f32 %v1033, %v1044
      %v1061 = vadd.f32 %v1036, %v1044
      %v1062 = vmax.f32 %v1046, 0.0
      %v1063 = vmax.f32 %v1047, 0.0
      %v1064 = vmax.f32 %v1048, 0.0
      %v1065 = vmax.f32 %v1049, 0.0
      %v1066 = vmax.f32 %v1050, 0.0
      %v1067 = vmax.f32 %v1051, 0.0
      %v1068 = vmax.f32 %v1052, 0.0
      %v1069 = vmax.f32 %v1053, 0.0
      %v1070 = vmax.f32 %v1054, 0.0
      %v1071 = vmax.f32 %v1055, 0.0
      %v1072 = vmax.f32 %v1056, 0.0
      %v1073 = vmax.f32 %v1057, 0.0
      %v1074 = vmax.f32 %v1058, 0.0
      %v1075 = vmax.f32 %v1059, 0.0
      %v1076 = vmax.f32 %v1060, 0.0
      %v1077 = vmax.f32 %v1061, 0.0
      %v1078 = vpack.c.bf16 %v1063, %v1062
      %v1079 = vpack.c.bf16 %v1065, %v1064
      %v1080 = vpack.c.bf16 %v1067, %v1066
      %v1081 = vpack.c.bf16 %v1069, %v1068
      %v1082 = vpack.c.bf16 %v1071, %v1070
      %v1083 = vpack.c.bf16 %v1073, %v1072
      %v1084 = vpack.c.bf16 %v1075, %v1074
      %v1085 = vpack.c.bf16 %v1077, %v1076
      %v1086 = vld [vmem:[%s7] sm:$0xf]
      %v1087 = vld [vmem:[%s7 + $0x4] sm:$0xf]
      %v1088 = vld [vmem:[%s7 + $0x8] sm:$0xf]
      %v1089 = vld [vmem:[%s7 + $0xc] sm:$0xf]
      %v1090 = vld [vmem:[%s7 + $0x10] sm:$0xf]
      %v1091 = vld [vmem:[%s7 + $0x14] sm:$0xf]
      %v1092 = vld [vmem:[%s7 + $0x18] sm:$0xf]
      %v1093 = vld [vmem:[%s7 + $0x1c] sm:$0xf]
      %v1094 = vld [vmem:[%s8] sm:$0x1]
      %v1096 = vlaneseq
      %v1097 = vshrl.u32 %v1096, 7
      %v1098 = vsub.s32 0, %v1097
      %v1099 = vrot.slane %v1094, %v1098
      %v1109 = vunpack.c.l.b16 %v1086
      %v1110 = vunpack.c.l.b16 %v1087
      %v1111 = vunpack.c.l.b16 %v1088
      %v1112 = vunpack.c.l.b16 %v1089
      %v1113 = vunpack.c.l.b16 %v1090
      %v1114 = vunpack.c.l.b16 %v1091
      %v1115 = vunpack.c.l.b16 %v1092
      %v1116 = vunpack.c.l.b16 %v1093
      %v1117 = vpack.c.b16 %v1110, %v1109
      %v1118 = vpack.c.b16 %v1112, %v1111
      %v1119 = vpack.c.b16 %v1114, %v1113
      %v1120 = vpack.c.b16 %v1116, %v1115
      %v1126 = vsel %vm732, %v1078, 0
      %v1129 = vsel %vm732, %v1079, 0
      %v1132 = vsel %vm732, %v1080, 0
      %v1135 = vsel %vm732, %v1081, 0
      %v1138 = vsel %vm732, %v1082, 0
      %v1141 = vsel %vm732, %v1083, 0
      %v1144 = vsel %vm732, %v1084, 0
      %v1147 = vsel %vm732, %v1085, 0
      %1149 = vmatprep.subr.bf16.mxu0 0
      %1150 = vmatpush1.bf16.msra.mxu0 0
      %1151 = vmatprep.subr.bf16.mxu0 0
      %1152 = vmatpush1.bf16.msra.mxu0 0
      %1153 = vmatprep.subr.bf16.mxu0 0
      %1154 = vmatpush1.bf16.msra.mxu0 0
      %1155 = vmatprep.subr.bf16.mxu0 0
      %1156 = vmatpush1.bf16.msra.mxu0 0
      %1157 = vmatprep.subr.bf16.mxu0 0
      %1158 = vmatpush1.bf16.msra.mxu0 %v1120
      %1159 = vmatprep.subr.bf16.mxu0 0
      %1160 = vmatpush1.bf16.msra.mxu0 %v1119
      %1161 = vmatprep.subr.bf16.mxu0 0
      %1162 = vmatpush1.bf16.msra.mxu0 %v1118
      %1163 = vmatprep.subr.bf16.mxu0 0
      %1164 = vmatpush1.bf16.msra.mxu0 %v1117
      %1165 = vmatprep.subr.bf16.mxu0 0
      %1166 = vmatpush2.bf16.msra.mxu0 0
      %1167 = vmatprep.subr.bf16.mxu0 0
      %1168 = vmatpush2.bf16.msra.mxu0 0
      %1169 = vmatprep.subr.bf16.mxu0 0
      %1170 = vmatpush2.bf16.msra.mxu0 0
      %1171 = vmatprep.subr.bf16.mxu0 0
      %1172 = vmatpush2.bf16.msra.mxu0 0
      %1173 = vmatprep.subr.bf16.mxu0 0
      %1174 = vmatpush2.bf16.msra.mxu0 0
      %1175 = vmatprep.subr.bf16.mxu0 0
      %1176 = vmatpush2.bf16.msra.mxu0 0
      %1177 = vmatprep.subr.bf16.mxu0 0
      %1178 = vmatpush2.bf16.msra.mxu0 0
      %1179 = vmatprep.subr.bf16.mxu0 0
      %1180 = vmatpush2.bf16.msra.mxu0 0
      %1181 = vmatprep.mubr.bf16.mxu0 0
      %1182 = vmatmul.mubr.bf16.gmra.mxu0 %v1126
      %v1183 = vpop.f32.mrf.mxu0
      %v1184 = vadd.f32 %v1099, %v1183
      %v1185 = vpop.f32.mrf.mxu0
      %v1186 = vpop.f32.mrf.mxu0
      %v1187 = vadd.f32 %v1099, %v1186
      %v1188 = vpop.f32.mrf.mxu0
      %1189 = vmatprep.mubr.bf16.mxu0 0
      %1190 = vmatmul.mubr.bf16.gmra.mxu0 %v1129
      %v1191 = vpop.f32.mrf.mxu0
      %v1192 = vadd.f32 %v1099, %v1191
      %v1193 = vpop.f32.mrf.mxu0
      %v1194 = vpop.f32.mrf.mxu0
      %v1195 = vadd.f32 %v1099, %v1194
      %v1196 = vpop.f32.mrf.mxu0
      %1197 = vmatprep.mubr.bf16.mxu0 0
      %1198 = vmatmul.mubr.bf16.gmra.mxu0 %v1132
      %v1199 = vpop.f32.mrf.mxu0
      %v1200 = vadd.f32 %v1099, %v1199
      %v1201 = vpop.f32.mrf.mxu0
      %v1202 = vpop.f32.mrf.mxu0
      %v1203 = vadd.f32 %v1099, %v1202
      %v1204 = vpop.f32.mrf.mxu0
      %1205 = vmatprep.mubr.bf16.mxu0 0
      %1206 = vmatmul.mubr.bf16.gmra.mxu0 %v1135
      %v1207 = vpop.f32.mrf.mxu0
      %v1208 = vadd.f32 %v1099, %v1207
      %v1209 = vpop.f32.mrf.mxu0
      %v1210 = vpop.f32.mrf.mxu0
      %v1211 = vadd.f32 %v1099, %v1210
      %v1212 = vpop.f32.mrf.mxu0
      %1213 = vmatprep.mubr.bf16.mxu0 0
      %1214 = vmatmul.mubr.bf16.gmra.mxu0 %v1138
      %v1215 = vpop.f32.mrf.mxu0
      %v1216 = vadd.f32 %v1099, %v1215
      %v1217 = vpop.f32.mrf.mxu0
      %v1218 = vpop.f32.mrf.mxu0
      %v1219 = vadd.f32 %v1099, %v1218
      %v1220 = vpop.f32.mrf.mxu0
      %1221 = vmatprep.mubr.bf16.mxu0 0
      %1222 = vmatmul.mubr.bf16.gmra.mxu0 %v1141
      %v1223 = vpop.f32.mrf.mxu0
      %v1224 = vadd.f32 %v1099, %v1223
      %v1225 = vpop.f32.mrf.mxu0
      %v1226 = vpop.f32.mrf.mxu0
      %v1227 = vadd.f32 %v1099, %v1226
      %v1228 = vpop.f32.mrf.mxu0
      %1229 = vmatprep.mubr.bf16.mxu0 0
      %1230 = vmatmul.mubr.bf16.gmra.mxu0 %v1144
      %v1231 = vpop.f32.mrf.mxu0
      %v1232 = vadd.f32 %v1099, %v1231
      %v1233 = vpop.f32.mrf.mxu0
      %v1234 = vpop.f32.mrf.mxu0
      %v1235 = vadd.f32 %v1099, %v1234
      %v1236 = vpop.f32.mrf.mxu0
      %1237 = vmatprep.mubr.bf16.mxu0 0
      %1238 = vmatmul.mubr.bf16.gmra.mxu0 %v1147
      %v1239 = vpop.f32.mrf.mxu0
      %v1240 = vadd.f32 %v1099, %v1239
      %v1241 = vpop.f32.mrf.mxu0
      %v1242 = vpop.f32.mrf.mxu0
      %v1243 = vadd.f32 %v1099, %v1242
      %v1244 = vpop.f32.mrf.mxu0
      %1245 = vdwg.mxu0
      %v1246 = vmax.f32 %v1184, 0.0
      %v1247 = vmax.f32 %v1187, 0.0
      %v1248 = vmax.f32 %v1192, 0.0
      %v1249 = vmax.f32 %v1195, 0.0
      %v1250 = vmax.f32 %v1200, 0.0
      %v1251 = vmax.f32 %v1203, 0.0
      %v1252 = vmax.f32 %v1208, 0.0
      %v1253 = vmax.f32 %v1211, 0.0
      %v1254 = vmax.f32 %v1216, 0.0
      %v1255 = vmax.f32 %v1219, 0.0
      %v1256 = vmax.f32 %v1224, 0.0
      %v1257 = vmax.f32 %v1227, 0.0
      %v1258 = vmax.f32 %v1232, 0.0
      %v1259 = vmax.f32 %v1235, 0.0
      %v1260 = vmax.f32 %v1240, 0.0
      %v1261 = vmax.f32 %v1243, 0.0
      %v1262 = vpack.c.bf16 %v1247, %v1246
      %v1263 = vpack.c.bf16 %v1249, %v1248
      %v1264 = vpack.c.bf16 %v1251, %v1250
      %v1265 = vpack.c.bf16 %v1253, %v1252
      %v1266 = vpack.c.bf16 %v1255, %v1254
      %v1267 = vpack.c.bf16 %v1257, %v1256
      %v1268 = vpack.c.bf16 %v1259, %v1258
      %v1269 = vpack.c.bf16 %v1261, %v1260
      %v1270 = vld [vmem:[%s9] sm:$0xf]
      %v1271 = vld [vmem:[%s9 + $0x4] sm:$0xf]
      %v1272 = vld [vmem:[%s9 + $0x8] sm:$0xf]
      %v1273 = vld [vmem:[%s9 + $0xc] sm:$0xf]
      %v1274 = vld [vmem:[%s10] sm:$0x1]
      %v1276 = vlaneseq
      %v1277 = vshrl.u32 %v1276, 7
      %v1278 = vsub.s32 0, %v1277
      %v1279 = vrot.slane %v1274, %v1278
      %v1285 = vunpack.c.l.b16 %v1270
      %v1286 = vunpack.c.l.b16 %v1271
      %v1287 = vunpack.c.l.b16 %v1272
      %v1288 = vunpack.c.l.b16 %v1273
      %v1289 = vpack.c.b16 %v1286, %v1285
      %v1290 = vpack.c.b16 %v1288, %v1287
      %vm1293 = vcmask 261120
      %v1295 = vsel %vm1293, %v1262, 0
      %v1298 = vsel %vm1293, %v1263, 0
      %v1301 = vsel %vm1293, %v1264, 0
      %v1304 = vsel %vm1293, %v1265, 0
      %v1307 = vsel %vm1293, %v1266, 0
      %v1310 = vsel %vm1293, %v1267, 0
      %v1313 = vsel %vm1293, %v1268, 0
      %v1316 = vsel %vm1293, %v1269, 0
      %1318 = vmatprep.subr.bf16.mxu0 0
      %1319 = vmatpush1.bf16.msra.mxu0 0
      %1320 = vmatprep.subr.bf16.mxu0 0
      %1321 = vmatpush1.bf16.msra.mxu0 0
      %1322 = vmatprep.subr.bf16.mxu0 0
      %1323 = vmatpush1.bf16.msra.mxu0 0
      %1324 = vmatprep.subr.bf16.mxu0 0
      %1325 = vmatpush1.bf16.msra.mxu0 0
      %1326 = vmatprep.subr.bf16.mxu0 0
      %1327 = vmatpush1.bf16.msra.mxu0 0
      %1328 = vmatprep.subr.bf16.mxu0 0
      %1329 = vmatpush1.bf16.msra.mxu0 0
      %1330 = vmatprep.subr.bf16.mxu0 0
      %1331 = vmatpush1.bf16.msra.mxu0 %v1290
      %1332 = vmatprep.subr.bf16.mxu0 0
      %1333 = vmatpush1.bf16.msra.mxu0 %v1289
      %1334 = vmatprep.subr.bf16.mxu0 0
      %1335 = vmatpush2.bf16.msra.mxu0 0
      %1336 = vmatprep.subr.bf16.mxu0 0
      %1337 = vmatpush2.bf16.msra.mxu0 0
      %1338 = vmatprep.subr.bf16.mxu0 0
      %1339 = vmatpush2.bf16.msra.mxu0 0
      %1340 = vmatprep.subr.bf16.mxu0 0
      %1341 = vmatpush2.bf16.msra.mxu0 0
      %1342 = vmatprep.subr.bf16.mxu0 0
      %1343 = vmatpush2.bf16.msra.mxu0 0
      %1344 = vmatprep.subr.bf16.mxu0 0
      %1345 = vmatpush2.bf16.msra.mxu0 0
      %1346 = vmatprep.subr.bf16.mxu0 0
      %1347 = vmatpush2.bf16.msra.mxu0 0
      %1348 = vmatprep.subr.bf16.mxu0 0
      %1349 = vmatpush2.bf16.msra.mxu0 0
      %1350 = vmatprep.mubr.bf16.mxu0 0
      %1351 = vmatmul.mubr.bf16.gmra.mxu0 %v1295
      %v1352 = vpop.f32.mrf.mxu0
      %v1353 = vadd.f32 %v1279, %v1352
      %v1354 = vpop.f32.mrf.mxu0
      %v1355 = vpop.f32.mrf.mxu0
      %v1356 = vadd.f32 %v1279, %v1355
      %v1357 = vpop.f32.mrf.mxu0
      %1358 = vmatprep.mubr.bf16.mxu0 0
      %1359 = vmatmul.mubr.bf16.gmra.mxu0 %v1298
      %v1360 = vpop.f32.mrf.mxu0
      %v1361 = vadd.f32 %v1279, %v1360
      %v1362 = vpop.f32.mrf.mxu0
      %v1363 = vpop.f32.mrf.mxu0
      %v1364 = vadd.f32 %v1279, %v1363
      %v1365 = vpop.f32.mrf.mxu0
      %1366 = vmatprep.mubr.bf16.mxu0 0
      %1367 = vmatmul.mubr.bf16.gmra.mxu0 %v1301
      %v1368 = vpop.f32.mrf.mxu0
      %v1369 = vadd.f32 %v1279, %v1368
      %v1370 = vpop.f32.mrf.mxu0
      %v1371 = vpop.f32.mrf.mxu0
      %v1372 = vadd.f32 %v1279, %v1371
      %v1373 = vpop.f32.mrf.mxu0
      %1374 = vmatprep.mubr.bf16.mxu0 0
      %1375 = vmatmul.mubr.bf16.gmra.mxu0 %v1304
      %v1376 = vpop.f32.mrf.mxu0
      %v1377 = vadd.f32 %v1279, %v1376
      %v1378 = vpop.f32.mrf.mxu0
      %v1379 = vpop.f32.mrf.mxu0
      %v1380 = vadd.f32 %v1279, %v1379
      %v1381 = vpop.f32.mrf.mxu0
      %1382 = vmatprep.mubr.bf16.mxu0 0
      %1383 = vmatmul.mubr.bf16.gmra.mxu0 %v1307
      %v1384 = vpop.f32.mrf.mxu0
      %v1385 = vadd.f32 %v1279, %v1384
      %v1386 = vpop.f32.mrf.mxu0
      %v1387 = vpop.f32.mrf.mxu0
      %v1388 = vadd.f32 %v1279, %v1387
      %v1389 = vpop.f32.mrf.mxu0
      %1390 = vmatprep.mubr.bf16.mxu0 0
      %1391 = vmatmul.mubr.bf16.gmra.mxu0 %v1310
      %v1392 = vpop.f32.mrf.mxu0
      %v1393 = vadd.f32 %v1279, %v1392
      %v1394 = vpop.f32.mrf.mxu0
      %v1395 = vpop.f32.mrf.mxu0
      %v1396 = vadd.f32 %v1279, %v1395
      %v1397 = vpop.f32.mrf.mxu0
      %1398 = vmatprep.mubr.bf16.mxu0 0
      %1399 = vmatmul.mubr.bf16.gmra.mxu0 %v1313
      %v1400 = vpop.f32.mrf.mxu0
      %v1401 = vadd.f32 %v1279, %v1400
      %v1402 = vpop.f32.mrf.mxu0
      %v1403 = vpop.f32.mrf.mxu0
      %v1404 = vadd.f32 %v1279, %v1403
      %v1405 = vpop.f32.mrf.mxu0
      %1406 = vmatprep.mubr.bf16.mxu0 0
      %1407 = vmatmul.mubr.bf16.gmra.mxu0 %v1316
      %v1408 = vpop.f32.mrf.mxu0
      %v1409 = vadd.f32 %v1279, %v1408
      %v1410 = vpop.f32.mrf.mxu0
      %v1411 = vpop.f32.mrf.mxu0
      %v1412 = vadd.f32 %v1279, %v1411
      %v1413 = vpop.f32.mrf.mxu0
      %1414 = vdwg.mxu0
      %v1415 = vmax.f32 %v1353, 0.0
      %v1416 = vmax.f32 %v1356, 0.0
      %v1417 = vmax.f32 %v1361, 0.0
      %v1418 = vmax.f32 %v1364, 0.0
      %v1419 = vmax.f32 %v1369, 0.0
      %v1420 = vmax.f32 %v1372, 0.0
      %v1421 = vmax.f32 %v1377, 0.0
      %v1422 = vmax.f32 %v1380, 0.0
      %v1423 = vmax.f32 %v1385, 0.0
      %v1424 = vmax.f32 %v1388, 0.0
      %v1425 = vmax.f32 %v1393, 0.0
      %v1426 = vmax.f32 %v1396, 0.0
      %v1427 = vmax.f32 %v1401, 0.0
      %v1428 = vmax.f32 %v1404, 0.0
      %v1429 = vmax.f32 %v1409, 0.0
      %v1430 = vmax.f32 %v1412, 0.0
      %v1431 = vld [vmem:[%s11] sm:$0x1]
      %v1433 = vlaneseq
      %v1434 = vshrl.u32 %v1433, 7
      %v1435 = vsub.s32 0, %v1434
      %v1436 = vrot.slane %v1431, %v1435
      %v1438 = vmul.f32 %v604, %v1436
      %v1439 = vmul.f32 %v605, %v1436
      %v1440 = vmul.f32 %v606, %v1436
      %v1441 = vmul.f32 %v607, %v1436
      %v1442 = vmul.f32 %v608, %v1436
      %v1443 = vmul.f32 %v609, %v1436
      %v1444 = vmul.f32 %v610, %v1436
      %v1445 = vmul.f32 %v611, %v1436
      %v1446 = vmul.f32 %v612, %v1436
      %v1447 = vmul.f32 %v613, %v1436
      %v1448 = vmul.f32 %v614, %v1436
      %v1449 = vmul.f32 %v615, %v1436
      %v1450 = vmul.f32 %v616, %v1436
      %v1451 = vmul.f32 %v617, %v1436
      %v1452 = vmul.f32 %v618, %v1436
      %v1453 = vmul.f32 %v619, %v1436
      %v1454 = vsel %vm1293, %v1438, 0.0
      %1455 = vadd.xlane.f32.xlu0 %v1454
      %v1456 = vpop.xlane.xlu0 %1455
      %v1457 = vsel %vm1293, %v1439, 0.0
      %1458 = vadd.xlane.f32.xlu0 %v1457
      %v1459 = vpop.xlane.xlu0 %1458
      %v1460 = vsel %vm1293, %v1440, 0.0
      %1461 = vadd.xlane.f32.xlu0 %v1460
      %v1462 = vpop.xlane.xlu0 %1461
      %v1463 = vsel %vm1293, %v1441, 0.0
      %1464 = vadd.xlane.f32.xlu0 %v1463
      %v1465 = vpop.xlane.xlu0 %1464
      %v1466 = vsel %vm1293, %v1442, 0.0
      %1467 = vadd.xlane.f32.xlu0 %v1466
      %v1468 = vpop.xlane.xlu0 %1467
      %v1469 = vsel %vm1293, %v1443, 0.0
      %1470 = vadd.xlane.f32.xlu0 %v1469
      %v1471 = vpop.xlane.xlu0 %1470
      %v1472 = vsel %vm1293, %v1444, 0.0
      %1473 = vadd.xlane.f32.xlu0 %v1472
      %v1474 = vpop.xlane.xlu0 %1473
      %v1475 = vsel %vm1293, %v1445, 0.0
      %1476 = vadd.xlane.f32.xlu0 %v1475
      %v1477 = vpop.xlane.xlu0 %1476
      %v1478 = vsel %vm1293, %v1446, 0.0
      %1479 = vadd.xlane.f32.xlu0 %v1478
      %v1480 = vpop.xlane.xlu0 %1479
      %v1481 = vsel %vm1293, %v1447, 0.0
      %1482 = vadd.xlane.f32.xlu0 %v1481
      %v1483 = vpop.xlane.xlu0 %1482
      %v1484 = vsel %vm1293, %v1448, 0.0
      %1485 = vadd.xlane.f32.xlu0 %v1484
      %v1486 = vpop.xlane.xlu0 %1485
      %v1487 = vsel %vm1293, %v1449, 0.0
      %1488 = vadd.xlane.f32.xlu0 %v1487
      %v1489 = vpop.xlane.xlu0 %1488
      %v1490 = vsel %vm1293, %v1450, 0.0
      %1491 = vadd.xlane.f32.xlu0 %v1490
      %v1492 = vpop.xlane.xlu0 %1491
      %v1493 = vsel %vm1293, %v1451, 0.0
      %1494 = vadd.xlane.f32.xlu0 %v1493
      %v1495 = vpop.xlane.xlu0 %1494
      %v1496 = vsel %vm1293, %v1452, 0.0
      %1497 = vadd.xlane.f32.xlu0 %v1496
      %v1498 = vpop.xlane.xlu0 %1497
      %v1499 = vsel %vm1293, %v1453, 0.0
      %1500 = vadd.xlane.f32.xlu0 %v1499
      %v1501 = vpop.xlane.xlu0 %1500
      %v1502 = vld [vmem:[%s12] sm:$0x1]
      %v1504 = vlaneseq
      %v1505 = vshrl.u32 %v1504, 7
      %v1506 = vsub.s32 0, %v1505
      %v1507 = vrot.slane %v1502, %v1506
      %v1509 = vmul.f32 %v1415, %v1507
      %v1510 = vmul.f32 %v1416, %v1507
      %v1511 = vmul.f32 %v1417, %v1507
      %v1512 = vmul.f32 %v1418, %v1507
      %v1513 = vmul.f32 %v1419, %v1507
      %v1514 = vmul.f32 %v1420, %v1507
      %v1515 = vmul.f32 %v1421, %v1507
      %v1516 = vmul.f32 %v1422, %v1507
      %v1517 = vmul.f32 %v1423, %v1507
      %v1518 = vmul.f32 %v1424, %v1507
      %v1519 = vmul.f32 %v1425, %v1507
      %v1520 = vmul.f32 %v1426, %v1507
      %v1521 = vmul.f32 %v1427, %v1507
      %v1522 = vmul.f32 %v1428, %v1507
      %v1523 = vmul.f32 %v1429, %v1507
      %v1524 = vmul.f32 %v1430, %v1507
      %vm1525 = vcmask 130048
      %v1526 = vsel %vm1525, %v1509, 0.0
      %1527 = vadd.xlane.f32.xlu0 %v1526
      %v1528 = vpop.xlane.xlu0 %1527
      %v1529 = vsel %vm1525, %v1510, 0.0
      %1530 = vadd.xlane.f32.xlu0 %v1529
      %v1531 = vpop.xlane.xlu0 %1530
      %v1532 = vsel %vm1525, %v1511, 0.0
      %1533 = vadd.xlane.f32.xlu0 %v1532
      %v1534 = vpop.xlane.xlu0 %1533
      %v1535 = vsel %vm1525, %v1512, 0.0
      %1536 = vadd.xlane.f32.xlu0 %v1535
      %v1537 = vpop.xlane.xlu0 %1536
      %v1538 = vsel %vm1525, %v1513, 0.0
      %1539 = vadd.xlane.f32.xlu0 %v1538
      %v1540 = vpop.xlane.xlu0 %1539
      %v1541 = vsel %vm1525, %v1514, 0.0
      %1542 = vadd.xlane.f32.xlu0 %v1541
      %v1543 = vpop.xlane.xlu0 %1542
      %v1544 = vsel %vm1525, %v1515, 0.0
      %1545 = vadd.xlane.f32.xlu0 %v1544
      %v1546 = vpop.xlane.xlu0 %1545
      %v1547 = vsel %vm1525, %v1516, 0.0
      %1548 = vadd.xlane.f32.xlu0 %v1547
      %v1549 = vpop.xlane.xlu0 %1548
      %v1550 = vsel %vm1525, %v1517, 0.0
      %1551 = vadd.xlane.f32.xlu0 %v1550
      %v1552 = vpop.xlane.xlu0 %1551
      %v1553 = vsel %vm1525, %v1518, 0.0
      %1554 = vadd.xlane.f32.xlu0 %v1553
      %v1555 = vpop.xlane.xlu0 %1554
      %v1556 = vsel %vm1525, %v1519, 0.0
      %1557 = vadd.xlane.f32.xlu0 %v1556
      %v1558 = vpop.xlane.xlu0 %1557
      %v1559 = vsel %vm1525, %v1520, 0.0
      %1560 = vadd.xlane.f32.xlu0 %v1559
      %v1561 = vpop.xlane.xlu0 %1560
      %v1562 = vsel %vm1525, %v1521, 0.0
      %1563 = vadd.xlane.f32.xlu0 %v1562
      %v1564 = vpop.xlane.xlu0 %1563
      %v1565 = vsel %vm1525, %v1522, 0.0
      %1566 = vadd.xlane.f32.xlu0 %v1565
      %v1567 = vpop.xlane.xlu0 %1566
      %v1568 = vsel %vm1525, %v1523, 0.0
      %1569 = vadd.xlane.f32.xlu0 %v1568
      %v1570 = vpop.xlane.xlu0 %1569
      %v1571 = vsel %vm1525, %v1524, 0.0
      %1572 = vadd.xlane.f32.xlu0 %v1571
      %v1573 = vpop.xlane.xlu0 %1572
      %v1574 = vadd.f32 %v1456, %v1528
      %v1575 = vadd.f32 %v1459, %v1531
      %v1576 = vadd.f32 %v1462, %v1534
      %v1577 = vadd.f32 %v1465, %v1537
      %v1578 = vadd.f32 %v1468, %v1540
      %v1579 = vadd.f32 %v1471, %v1543
      %v1580 = vadd.f32 %v1474, %v1546
      %v1581 = vadd.f32 %v1477, %v1549
      %v1582 = vadd.f32 %v1480, %v1552
      %v1583 = vadd.f32 %v1483, %v1555
      %v1584 = vadd.f32 %v1486, %v1558
      %v1585 = vadd.f32 %v1489, %v1561
      %v1586 = vadd.f32 %v1492, %v1564
      %v1587 = vadd.f32 %v1495, %v1567
      %v1588 = vadd.f32 %v1498, %v1570
      %v1589 = vadd.f32 %v1501, %v1573
      %v1590 = vld [vmem:[#allocation2] sm:$0x1]
      %v1592 = vlaneseq
      %v1593 = vshrl.u32 %v1592, 7
      %v1594 = vsub.s32 0, %v1593
      %v1595 = vrot.slane %v1590, %v1594
      %v1597 = vadd.f32 %v1574, %v1595
      %v1598 = vadd.f32 %v1575, %v1595
      %v1599 = vadd.f32 %v1576, %v1595
      %v1600 = vadd.f32 %v1577, %v1595
      %v1601 = vadd.f32 %v1578, %v1595
      %v1602 = vadd.f32 %v1579, %v1595
      %v1603 = vadd.f32 %v1580, %v1595
      %v1604 = vadd.f32 %v1581, %v1595
      %v1605 = vadd.f32 %v1582, %v1595
      %v1606 = vadd.f32 %v1583, %v1595
      %v1607 = vadd.f32 %v1584, %v1595
      %v1608 = vadd.f32 %v1585, %v1595
      %v1609 = vadd.f32 %v1586, %v1595
      %v1610 = vadd.f32 %v1587, %v1595
      %v1611 = vadd.f32 %v1588, %v1595
      %v1612 = vadd.f32 %v1589, %v1595
      %v1613 = vxor.u32 %v1597, 2147483648
      %v1614 = vxor.u32 %v1598, 2147483648
      %v1615 = vxor.u32 %v1599, 2147483648
      %v1616 = vxor.u32 %v1600, 2147483648
      %v1617 = vxor.u32 %v1601, 2147483648
      %v1618 = vxor.u32 %v1602, 2147483648
      %v1619 = vxor.u32 %v1603, 2147483648
      %v1620 = vxor.u32 %v1604, 2147483648
      %v1621 = vxor.u32 %v1605, 2147483648
      %v1622 = vxor.u32 %v1606, 2147483648
      %v1623 = vxor.u32 %v1607, 2147483648
      %v1624 = vxor.u32 %v1608, 2147483648
      %v1625 = vxor.u32 %v1609, 2147483648
      %v1626 = vxor.u32 %v1610, 2147483648
      %v1627 = vxor.u32 %v1611, 2147483648
      %v1628 = vxor.u32 %v1612, 2147483648
      %v1629 = vmul.f32 %v1613, 1.442695
      %v1630 = vpow.pop %v1629
      %v1631 = vmul.f32 %v1614, 1.442695
      %v1632 = vpow.pop %v1631
      %v1633 = vmul.f32 %v1615, 1.442695
      %v1634 = vpow.pop %v1633
      %v1635 = vmul.f32 %v1616, 1.442695
      %v1636 = vpow.pop %v1635
      %v1637 = vmul.f32 %v1617, 1.442695
      %v1638 = vpow.pop %v1637
      %v1639 = vmul.f32 %v1618, 1.442695
      %v1640 = vpow.pop %v1639
      %v1641 = vmul.f32 %v1619, 1.442695
      %v1642 = vpow.pop %v1641
      %v1643 = vmul.f32 %v1620, 1.442695
      %v1644 = vpow.pop %v1643
      %v1645 = vmul.f32 %v1621, 1.442695
      %v1646 = vpow.pop %v1645
      %v1647 = vmul.f32 %v1622, 1.442695
      %v1648 = vpow.pop %v1647
      %v1649 = vmul.f32 %v1623, 1.442695
      %v1650 = vpow.pop %v1649
      %v1651 = vmul.f32 %v1624, 1.442695
      %v1652 = vpow.pop %v1651
      %v1653 = vmul.f32 %v1625, 1.442695
      %v1654 = vpow.pop %v1653
      %v1655 = vmul.f32 %v1626, 1.442695
      %v1656 = vpow.pop %v1655
      %v1657 = vmul.f32 %v1627, 1.442695
      %v1658 = vpow.pop %v1657
      %v1659 = vmul.f32 %v1628, 1.442695
      %v1660 = vpow.pop %v1659
      %v1661 = vadd.f32 %v1630, 1.0
      %v1662 = vadd.f32 %v1632, 1.0
      %v1663 = vadd.f32 %v1634, 1.0
      %v1664 = vadd.f32 %v1636, 1.0
      %v1665 = vadd.f32 %v1638, 1.0
      %v1666 = vadd.f32 %v1640, 1.0
      %v1667 = vadd.f32 %v1642, 1.0
      %v1668 = vadd.f32 %v1644, 1.0
      %v1669 = vadd.f32 %v1646, 1.0
      %v1670 = vadd.f32 %v1648, 1.0
      %v1671 = vadd.f32 %v1650, 1.0
      %v1672 = vadd.f32 %v1652, 1.0
      %v1673 = vadd.f32 %v1654, 1.0
      %v1674 = vadd.f32 %v1656, 1.0
      %v1675 = vadd.f32 %v1658, 1.0
      %v1676 = vadd.f32 %v1660, 1.0
      %v1677 = vrcp.pop %v1661
      %v1678 = vmul.f32 1.0, %v1677
      %v1679 = vrcp.pop %v1662
      %v1680 = vmul.f32 1.0, %v1679
      %v1681 = vrcp.pop %v1663
      %v1682 = vmul.f32 1.0, %v1681
      %v1683 = vrcp.pop %v1664
      %v1684 = vmul.f32 1.0, %v1683
      %v1685 = vrcp.pop %v1665
      %v1686 = vmul.f32 1.0, %v1685
      %v1687 = vrcp.pop %v1666
      %v1688 = vmul.f32 1.0, %v1687
      %v1689 = vrcp.pop %v1667
      %v1690 = vmul.f32 1.0, %v1689
      %v1691 = vrcp.pop %v1668
      %v1692 = vmul.f32 1.0, %v1691
      %v1693 = vrcp.pop %v1669
      %v1694 = vmul.f32 1.0, %v1693
      %v1695 = vrcp.pop %v1670
      %v1696 = vmul.f32 1.0, %v1695
      %v1697 = vrcp.pop %v1671
      %v1698 = vmul.f32 1.0, %v1697
      %v1699 = vrcp.pop %v1672
      %v1700 = vmul.f32 1.0, %v1699
      %v1701 = vrcp.pop %v1673
      %v1702 = vmul.f32 1.0, %v1701
      %v1703 = vrcp.pop %v1674
      %v1704 = vmul.f32 1.0, %v1703
      %v1705 = vrcp.pop %v1675
      %v1706 = vmul.f32 1.0, %v1705
      %v1707 = vrcp.pop %v1676
      %v1708 = vmul.f32 1.0, %v1707
      %vm1709 = vcmask 7168
      %1710 = vst.msk [vmem:[%s537] sm:$0xff] %vm1709, %v1678
      %1711 = vst.msk [vmem:[%s537 + $0x8] sm:$0xff] %vm1709, %v1680
      %1712 = vst.msk [vmem:[%s537 + $0x10] sm:$0xff] %vm1709, %v1682
      %1713 = vst.msk [vmem:[%s537 + $0x18] sm:$0xff] %vm1709, %v1684
      %1714 = vst.msk [vmem:[%s537 + $0x20] sm:$0xff] %vm1709, %v1686
      %1715 = vst.msk [vmem:[%s537 + $0x28] sm:$0xff] %vm1709, %v1688
      %1716 = vst.msk [vmem:[%s537 + $0x30] sm:$0xff] %vm1709, %v1690
      %1717 = vst.msk [vmem:[%s537 + $0x38] sm:$0xff] %vm1709, %v1692
      %1718 = vst.msk [vmem:[%s537 + $0x40] sm:$0xff] %vm1709, %v1694
      %1719 = vst.msk [vmem:[%s537 + $0x48] sm:$0xff] %vm1709, %v1696
      %1720 = vst.msk [vmem:[%s537 + $0x50] sm:$0xff] %vm1709, %v1698
      %1721 = vst.msk [vmem:[%s537 + $0x58] sm:$0xff] %vm1709, %v1700
      %1722 = vst.msk [vmem:[%s537 + $0x60] sm:$0xff] %vm1709, %v1702
      %1723 = vst.msk [vmem:[%s537 + $0x68] sm:$0xff] %vm1709, %v1704
      %1724 = vst.msk [vmem:[%s537 + $0x70] sm:$0xff] %vm1709, %v1706
      %1725 = vst.msk [vmem:[%s537 + $0x78] sm:$0xff] %vm1709, %v1708
      %s1726 = smul.u32 16, %s27
      %p1727 = scmp.lt.s32.totalorder %s1726, 31
      %s1728 = scalar_select %p1727, %s1726, 31
      %s1729 = smul.addr %s1728, 8
      %s1730 = scalar_lea.vmem %s14, %s1729
      // Predicated region
      $region77: #{tpu_custom_call.1} parent=75 // pred_check
        %p1731 = pneg %p359
      $region78: #{tpu_custom_call.1} parent=75 // pred_check_branch
        %1733 = sbr.rel (%p1731) target = $region80
      $region79: #{tpu_custom_call.1} parent=75 // pred_region
        %s1734 = smul.u32 16, %s27
      $region80: #{tpu_custom_call.1} parent=75 // pred_fallthru
        _
    $region76: #{tpu_custom_call.1} parent=5 // pred_fallthru
      _
    %p1735 = scmp.le.s32.totalorder 2, %s22
    // Predicated region
    $region81: #{tpu_custom_call.1} parent=5 // pred_check
      %p1736 = pneg %p1735
    $region82: #{tpu_custom_call.1} parent=5 // pred_check_branch
      %1738 = sbr.rel (%p1736) target = $region84
    $region83: #{tpu_custom_call.1} parent=5 // pred_region
      %s1739 = ssub.s32 %s22, 2
      // Predicated region
      $region85: #{tpu_custom_call.1} parent=83 // pred_check
        %p1740 = pneg %p365
      $region86: #{tpu_custom_call.1} parent=83 // pred_check_branch
        %1742 = sbr.rel (%p1740) target = $region88
      $region87: #{tpu_custom_call.1} parent=83 // pred_region
        %s1743 = smul.u32 16, %s28
        %p1744 = scmp.lt.s32.totalorder %s1743, 31
        %s1745 = scalar_select %p1744, %s1743, 31
        %s1746 = smul.addr %s1745, 8
        %s1747 = scalar_lea.vmem %s14, %s1746
      $region88: #{tpu_custom_call.1} parent=83 // pred_fallthru
        _
    $region84: #{tpu_custom_call.1} parent=5 // pred_fallthru
      _
  $region6: #{tpu_custom_call.1} parent=0 // loop_footer
    %s26 = sadd.s32 1, %s22
  $region7: #{tpu_custom_call.1} parent=0 // loop_footer_branch
    %21 = sbr.rel target = $region3
  $region8: #{tpu_custom_call.1} parent=0 // loop_exit
    _

</llo_original>
